<compile_context>
chip_gen: v5e
topology: v5e:2x2
jax: 0.10.0
libtpu: 0.0.40
codegen_flags: <defaults>
</compile_context>

<pallas_src>
import math
import functools

import jax
import jax.numpy as jnp
from jax import lax
from jax.experimental import pallas as pl
from jax.experimental.pallas import tpu as pltpu


def _mha_kernel(q_ref, k_ref, v_ref,
                wq_ref, bq_ref, wk_ref, bk_ref, wv_ref, bv_ref,
                wo_ref, bo_ref,
                *refs,
                depth: int, head_block: int, with_aw: bool, cache_kv: bool):
    refs = list(refs)
    out_ref = refs.pop(0)
    aw_ref = refs.pop(0) if with_aw else None
    if cache_kv:
        k_cache = refs.pop(0)
        v_cache = refs.pop(0)
    acc_ref = refs.pop(0)

    i = pl.program_id(1)
    hb = pl.program_id(2)
    n_hb = pl.num_programs(2)

    D = depth
    HB = head_block

    def project_kv():
        xk = k_ref[0]                                              # (S, H) bf16
        xv = v_ref[0]
        kb = jnp.dot(xk, wk_ref[0], preferred_element_type=jnp.float32) + bk_ref[0]
        vb = jnp.dot(xv, wv_ref[0], preferred_element_type=jnp.float32) + bv_ref[0]
        return kb.astype(jnp.bfloat16), vb.astype(jnp.bfloat16)    # (S, HB*D)

    if cache_kv:
        # Fill the per-head-block K/V cache on the first query tile of each
        # batch element; later query tiles reuse it (query-tile axis is
        # "arbitrary" in this mode, so i == 0 is always visited first).
        @pl.when(i == 0)
        def _():
            kb, vb = project_kv()
            k_cache[hb] = kb
            v_cache[hb] = vb
        k_blk = k_cache[hb]
        v_blk = v_cache[hb]
    else:
        k_blk, v_blk = project_kv()

    # Block-wide (lane-dense) Q projection; fold the 1/sqrt(D) scale into Q.
    xq = q_ref[0]                                                  # (tq, H) bf16
    qb = jnp.dot(xq, wq_ref[0], preferred_element_type=jnp.float32) + bq_ref[0]
    q_s = (qb * (1.0 / math.sqrt(D))).astype(jnp.bfloat16)         # (tq, HB*D)

    # Per-head attention inside the head block (static loop, HB small).
    pv_cols = []
    for hh in range(HB):
        lo, hi = hh * D, (hh + 1) * D
        qh = q_s[:, lo:hi]                                         # (tq, D) bf16
        kh = k_blk[:, lo:hi]                                       # (S,  D) bf16
        vh = v_blk[:, lo:hi]                                       # (S,  D) bf16

        # scores = Q @ K^T, contracting trailing dims (no XLU transpose).
        s = lax.dot_general(qh, kh, (((1,), (1,)), ((), ())),
                            preferred_element_type=jnp.float32)    # (tq, S)
        m = jnp.max(s, axis=-1, keepdims=True)
        e = jnp.exp(s - m)
        w = e * pl.reciprocal(jnp.sum(e, axis=-1, keepdims=True), approx=True)

        if aw_ref is not None:
            aw_ref[0, hh] = w.astype(aw_ref.dtype)

        pv_cols.append(jnp.dot(w.astype(jnp.bfloat16), vh,
                               preferred_element_type=jnp.float32))  # (tq, D)

    pv_blk = jnp.concatenate(pv_cols, axis=-1) if HB > 1 else pv_cols[0]

    # Fused slice of the output projection for this head block (lane-dense
    # contracting dim HB*D).
    contrib = jnp.dot(pv_blk.astype(jnp.bfloat16), wo_ref[0],
                      preferred_element_type=jnp.float32)          # (tq, H)

    @pl.when(hb == 0)
    def _():
        acc_ref[...] = jnp.zeros_like(acc_ref)

    acc_ref[...] += contrib

    @pl.when(hb == n_hb - 1)
    def _():
        out_ref[0] = (acc_ref[...] + bo_ref[...]).astype(out_ref.dtype)


def custom_multi_head_attention(q, k, v, params, *, num_heads: int,
                                tq: int | None = None,
                                head_block: int | None = None,
                                return_attention_weights: bool = True,
                                aw_dtype=jnp.float32,
                                compute_dtype=jnp.bfloat16):
    """q, k, v: (B, S, H). params: dict of wq,bq,wk,bk,wv,bv,wo,bo
    (weights pre-transposed to (in, out), biases (1, H)).

    Returns (output (B, S, H), attention_weights (B, num_heads, S, S))
    or just output if return_attention_weights=False."""
    B, S, H = q.shape
    assert H % num_heads == 0
    D = H // num_heads

    # Head blocking: HB * D should fill the MXU lane width (~256).
    if head_block is None:
        head_block = max(1, min(num_heads, 256 // max(D, 1)))
        head_block = math.gcd(num_heads, head_block)
    assert num_heads % head_block == 0
    HB = head_block
    BD = HB * D
    n_hb = num_heads // HB

    # Query tiling: cap tq so the (tq, S) scores / aw blocks stay VMEM-friendly.
    if tq is None:
        if S <= 256:
            tq = S
        else:
            tq = next((c for c in (256, 128, 64, 32, 16, 8) if S % c == 0), S)
        # v7x megacore: with B == 1 make sure there are >= 2 query tiles
        # (only if the halved tile stays (8,128)-legal).
        if B == 1 and S // tq < 2:
            half = tq // 2
            if half >= 8 and half % 8 == 0 and S % half == 0:
                tq = half
    assert S % tq == 0
    n_q = S // tq

    # Cache projected K/V across query tiles when it is safe w.r.t. megacore
    # sharding (fill happens at i == 0, so the query-tile axis must then be
    # "arbitrary"); with B == 1 we prefer megacore on the query-tile axis.
    cache_kv = (n_q > 1) and (B > 1)
    with_aw = return_attention_weights

    cd = compute_dtype
    cd_bytes = jnp.dtype(cd).itemsize

    # Pack weights per head block so each grid step only DMAs its own slab.
    wq = params["wq"].astype(cd).reshape(H, n_hb, BD).transpose(1, 0, 2)
    wk = params["wk"].astype(cd).reshape(H, n_hb, BD).transpose(1, 0, 2)
    wv = params["wv"].astype(cd).reshape(H, n_hb, BD).transpose(1, 0, 2)
    wo = params["wo"].astype(cd).reshape(n_hb, BD, H)
    bq = params["bq"].astype(jnp.float32).reshape(n_hb, 1, BD)
    bk = params["bk"].astype(jnp.float32).reshape(n_hb, 1, BD)
    bv = params["bv"].astype(jnp.float32).reshape(n_hb, 1, BD)
    bo = params["bo"].astype(jnp.float32).reshape(1, H)

    qc, kc, vc = q.astype(cd), k.astype(cd), v.astype(cd)

    kernel = functools.partial(_mha_kernel, depth=D, head_block=HB,
                               with_aw=with_aw, cache_kv=cache_kv)

    q_spec = pl.BlockSpec((1, tq, H), lambda b, i, h: (b, i, 0))
    kv_spec = pl.BlockSpec((1, S, H), lambda b, i, h: (b, 0, 0))
    w_in_spec = pl.BlockSpec((1, H, BD), lambda b, i, h: (h, 0, 0))
    b_in_spec = pl.BlockSpec((1, 1, BD), lambda b, i, h: (h, 0, 0))
    wo_spec = pl.BlockSpec((1, BD, H), lambda b, i, h: (h, 0, 0))
    bo_spec = pl.BlockSpec((1, H), lambda b, i, h: (0, 0))

    if with_aw:
        out_shape = (
            jax.ShapeDtypeStruct((B, S, H), q.dtype),
            jax.ShapeDtypeStruct((B, num_heads, S, S), aw_dtype),
        )
        out_specs = (
            pl.BlockSpec((1, tq, H), lambda b, i, h: (b, i, 0)),
            pl.BlockSpec((1, HB, tq, S), lambda b, i, h: (b, h, i, 0)),
        )
    else:
        out_shape = jax.ShapeDtypeStruct((B, S, H), q.dtype)
        out_specs = pl.BlockSpec((1, tq, H), lambda b, i, h: (b, i, 0))

    scratch_shapes = []
    if cache_kv:
        scratch_shapes += [pltpu.VMEM((n_hb, S, BD), jnp.bfloat16),
                           pltpu.VMEM((n_hb, S, BD), jnp.bfloat16)]
    scratch_shapes += [pltpu.VMEM((tq, H), jnp.float32)]

    # Derive a VMEM budget from the actual block sizes (double-buffered inputs
    # and outputs + scratch), clamped to fit every generation (v7x = 64 MiB).
    out_bytes = jnp.dtype(q.dtype).itemsize
    aw_bytes = jnp.dtype(aw_dtype).itemsize if with_aw else 0
    est = 0
    est += 2 * tq * H * cd_bytes                # q block
    est += 2 * 2 * S * H * cd_bytes             # k, v blocks
    est += 2 * 4 * H * BD * cd_bytes            # wq/wk/wv/wo blocks
    est += 2 * (3 * BD + H) * 4                 # biases
    est += 2 * tq * H * out_bytes               # out block
    est += 2 * HB * tq * S * aw_bytes           # attention-weights block
    if cache_kv:
        est += 2 * n_hb * S * BD * 2            # bf16 K/V projection caches
    est += tq * H * 4                           # f32 accumulator
    vmem_limit = int(min(max(int(est * 1.25) + (4 << 20), 32 << 20), 64 << 20))

    dim_sem = ("parallel",
               "arbitrary" if cache_kv else "parallel",
               "arbitrary")

    return pl.pallas_call(
        kernel,
        out_shape=out_shape,
        grid_spec=pltpu.PrefetchScalarGridSpec(
            num_scalar_prefetch=0,
            grid=(B, n_q, n_hb),
            in_specs=[
                q_spec, kv_spec, kv_spec,
                w_in_spec, b_in_spec,   # query_proj
                w_in_spec, b_in_spec,   # key_proj
                w_in_spec, b_in_spec,   # value_proj
                wo_spec, bo_spec,       # out_proj
            ],
            out_specs=out_specs,
            scratch_shapes=scratch_shapes,
        ),
        compiler_params=pltpu.CompilerParams(
            dimension_semantics=dim_sem,
            vmem_limit_bytes=vmem_limit,
        ),
    )(qc, kc, vc, wq, bq, wk, bk, wv, bv, wo, bo)


def _reference(q, k, v, params, num_heads):
    # Pure-JAX f32 reference mirroring the PyTorch module.
    B, S, H = q.shape
    D = H // num_heads

    def lin(x, w, b):
        return x @ w + b

    def split(x):
        return x.reshape(B, S, num_heads, D).transpose(0, 2, 1, 3)

    Q = split(lin(q, params["wq"], params["bq"]))
    K = split(lin(k, params["wk"], params["bk"]))
    V = split(lin(v, params["wv"], params["bv"]))
    scores = jnp.einsum("bhqd,bhkd->bhqk", Q, K) / math.sqrt(D)
    w = jax.nn.softmax(scores, axis=-1)
    o = jnp.einsum("bhqk,bhkd->bhqd", w, V)
    o = o.transpose(0, 2, 1, 3).reshape(B, S, H)
    return lin(o, params["wo"], params["bo"]), w


def _run_case(B, S, H, num_heads, tq=None):
    key = jax.random.PRNGKey(0)
    keys = jax.random.split(key, 11)
    scale = 1.0 / math.sqrt(H)
    params = {
        "wq": jax.random.uniform(keys[0], (H, H), jnp.float32, -scale, scale),
        "bq": jax.random.uniform(keys[1], (1, H), jnp.float32, -scale, scale),
        "wk": jax.random.uniform(keys[2], (H, H), jnp.float32, -scale, scale),
        "bk": jax.random.uniform(keys[3], (1, H), jnp.float32, -scale, scale),
        "wv": jax.random.uniform(keys[4], (H, H), jnp.float32, -scale, scale),
        "bv": jax.random.uniform(keys[5], (1, H), jnp.float32, -scale, scale),
        "wo": jax.random.uniform(keys[6], (H, H), jnp.float32, -scale, scale),
        "bo": jax.random.uniform(keys[7], (1, H), jnp.float32, -scale, scale),
    }
    q = jax.random.normal(keys[8], (B, S, H), jnp.float32)
    k = jax.random.normal(keys[9], (B, S, H), jnp.float32)
    v = jax.random.normal(keys[10], (B, S, H), jnp.float32)

    out, attn_w = custom_multi_head_attention(q, k, v, params,
                                              num_heads=num_heads, tq=tq)
    out = jax.block_until_ready(out)
    attn_w = jax.block_until_ready(attn_w)

    ref_out, ref_w = _reference(q, k, v, params, num_heads)
    assert out.shape == (B, S, H)
    assert attn_w.shape == (B, num_heads, S, S)
    # bf16 MXU operands (f32 accumulate) -> bf16-level tolerances vs f32 ref.
    assert jnp.allclose(out, ref_out, atol=5e-2, rtol=5e-2)
    assert jnp.allclose(attn_w, ref_w, atol=2e-2, rtol=2e-2)

    # Also exercise the no-attention-weights fast path.
    out_only = custom_multi_head_attention(q, k, v, params,
                                           num_heads=num_heads, tq=tq,
                                           return_attention_weights=False)
    out_only = jax.block_until_ready(out_only)
    assert jnp.allclose(out_only, ref_out, atol=5e-2, rtol=5e-2)


if __name__ == "__main__":
    # Small default case (single query tile, no K/V cache path).
    _run_case(B=2, S=8, H=32, num_heads=4)
    # Exercises query tiling + the cached K/V projection path.
    _run_case(B=2, S=16, H=32, num_heads=4, tq=8)
    print("KERNEL_OK")
</pallas_src>

<mosaic_0001>
module attributes {stable_mosaic.version = 11 : i64} {
  func.func @_mha_kernel(%arg0: i32, %arg1: i32, %arg2: i32, %arg3: memref<1x8x32xbf16, #tpu.memory_space<vmem>>, %arg4: memref<1x8x32xbf16, #tpu.memory_space<vmem>>, %arg5: memref<1x8x32xbf16, #tpu.memory_space<vmem>>, %arg6: memref<1x32x32xbf16, #tpu.memory_space<vmem>>, %arg7: memref<1x1x32xf32, #tpu.memory_space<vmem>>, %arg8: memref<1x32x32xbf16, #tpu.memory_space<vmem>>, %arg9: memref<1x1x32xf32, #tpu.memory_space<vmem>>, %arg10: memref<1x32x32xbf16, #tpu.memory_space<vmem>>, %arg11: memref<1x1x32xf32, #tpu.memory_space<vmem>>, %arg12: memref<1x32x32xbf16, #tpu.memory_space<vmem>>, %arg13: memref<1x32xf32, #tpu.memory_space<vmem>>, %arg14: memref<1x8x32xf32, #tpu.memory_space<vmem>>, %arg15: memref<1x4x8x8xf32, #tpu.memory_space<vmem>>, %arg16: memref<8x32xf32, #tpu.memory_space<vmem>>) attributes {dimension_semantics = [#tpu.dimension_semantics<parallel>, #tpu.dimension_semantics<parallel>, #tpu.dimension_semantics<arbitrary>], iteration_bounds = array<i64: 2, 1, 1>, scalar_prefetch = 0 : i64, scratch_operands = 1 : i64, tpu.core_type = #tpu.core_type<tc>, window_params = [{transform_indices = @transform_0, window_bounds = array<i64: 1, 8, 32>}, {transform_indices = @transform_1, window_bounds = array<i64: 1, 8, 32>}, {transform_indices = @transform_2, window_bounds = array<i64: 1, 8, 32>}, {transform_indices = @transform_3, window_bounds = array<i64: 1, 32, 32>}, {transform_indices = @transform_4, window_bounds = array<i64: 1, 1, 32>}, {transform_indices = @transform_5, window_bounds = array<i64: 1, 32, 32>}, {transform_indices = @transform_6, window_bounds = array<i64: 1, 1, 32>}, {transform_indices = @transform_7, window_bounds = array<i64: 1, 32, 32>}, {transform_indices = @transform_8, window_bounds = array<i64: 1, 1, 32>}, {transform_indices = @transform_9, window_bounds = array<i64: 1, 32, 32>}, {pipeline_mode = #tpu.pipeline_mode<synchronous>, transform_indices = @transform_10, window_bounds = array<i64: 1, 32>}, {transform_indices = @transform_11, window_bounds = array<i64: 1, 8, 32>}, {transform_indices = @transform_12, window_bounds = array<i64: 1, 4, 8, 8>}]} {
    %c0 = arith.constant 0 : index
    %c0_0 = arith.constant 0 : index
    %c0_1 = arith.constant 0 : index
    %0 = vector.load %arg4[%c0, %c0_0, %c0_1] : memref<1x8x32xbf16, #tpu.memory_space<vmem>>, vector<1x8x32xbf16>
    %1 = vector.shape_cast %0 : vector<1x8x32xbf16> to vector<8x32xbf16>
    %c0_2 = arith.constant 0 : index
    %c0_3 = arith.constant 0 : index
    %c0_4 = arith.constant 0 : index
    %2 = vector.load %arg5[%c0_2, %c0_3, %c0_4] : memref<1x8x32xbf16, #tpu.memory_space<vmem>>, vector<1x8x32xbf16>
    %3 = vector.shape_cast %2 : vector<1x8x32xbf16> to vector<8x32xbf16>
    %c0_5 = arith.constant 0 : index
    %c0_6 = arith.constant 0 : index
    %c0_7 = arith.constant 0 : index
    %4 = vector.load %arg8[%c0_5, %c0_6, %c0_7] : memref<1x32x32xbf16, #tpu.memory_space<vmem>>, vector<1x32x32xbf16>
    %5 = vector.shape_cast %4 : vector<1x32x32xbf16> to vector<32x32xbf16>
    %cst = arith.constant dense<0.000000e+00> : vector<8x32xf32>
    %6 = tpu.matmul %1, %5, %cst {dimension_numbers = #tpu.dot_dimension_numbers<[1], [0], [0], [1], [0, 0, 1, 1], [], []>} : vector<8x32xbf16>, vector<32x32xbf16>, vector<8x32xf32> -> vector<8x32xf32>
    %c0_8 = arith.constant 0 : index
    %c0_9 = arith.constant 0 : index
    %c0_10 = arith.constant 0 : index
    %7 = vector.load %arg9[%c0_8, %c0_9, %c0_10] : memref<1x1x32xf32, #tpu.memory_space<vmem>>, vector<1x1x32xf32>
    %8 = vector.shape_cast %7 : vector<1x1x32xf32> to vector<1x32xf32>
    %9 = vector.broadcast %8 : vector<1x32xf32> to vector<8x32xf32>
    %10 = arith.addf %6, %9 : vector<8x32xf32>
    %c0_11 = arith.constant 0 : index
    %c0_12 = arith.constant 0 : index
    %c0_13 = arith.constant 0 : index
    %11 = vector.load %arg10[%c0_11, %c0_12, %c0_13] : memref<1x32x32xbf16, #tpu.memory_space<vmem>>, vector<1x32x32xbf16>
    %12 = vector.shape_cast %11 : vector<1x32x32xbf16> to vector<32x32xbf16>
    %cst_14 = arith.constant dense<0.000000e+00> : vector<8x32xf32>
    %13 = tpu.matmul %3, %12, %cst_14 {dimension_numbers = #tpu.dot_dimension_numbers<[1], [0], [0], [1], [0, 0, 1, 1], [], []>} : vector<8x32xbf16>, vector<32x32xbf16>, vector<8x32xf32> -> vector<8x32xf32>
    %c0_15 = arith.constant 0 : index
    %c0_16 = arith.constant 0 : index
    %c0_17 = arith.constant 0 : index
    %14 = vector.load %arg11[%c0_15, %c0_16, %c0_17] : memref<1x1x32xf32, #tpu.memory_space<vmem>>, vector<1x1x32xf32>
    %15 = vector.shape_cast %14 : vector<1x1x32xf32> to vector<1x32xf32>
    %16 = vector.broadcast %15 : vector<1x32xf32> to vector<8x32xf32>
    %17 = arith.addf %13, %16 : vector<8x32xf32>
    %18 = arith.truncf %10 : vector<8x32xf32> to vector<8x32xbf16>
    %19 = arith.truncf %17 : vector<8x32xf32> to vector<8x32xbf16>
    %c0_18 = arith.constant 0 : index
    %c0_19 = arith.constant 0 : index
    %c0_20 = arith.constant 0 : index
    %20 = vector.load %arg3[%c0_18, %c0_19, %c0_20] : memref<1x8x32xbf16, #tpu.memory_space<vmem>>, vector<1x8x32xbf16>
    %21 = vector.shape_cast %20 : vector<1x8x32xbf16> to vector<8x32xbf16>
    %c0_21 = arith.constant 0 : index
    %c0_22 = arith.constant 0 : index
    %c0_23 = arith.constant 0 : index
    %22 = vector.load %arg6[%c0_21, %c0_22, %c0_23] : memref<1x32x32xbf16, #tpu.memory_space<vmem>>, vector<1x32x32xbf16>
    %23 = vector.shape_cast %22 : vector<1x32x32xbf16> to vector<32x32xbf16>
    %cst_24 = arith.constant dense<0.000000e+00> : vector<8x32xf32>
    %24 = tpu.matmul %21, %23, %cst_24 {dimension_numbers = #tpu.dot_dimension_numbers<[1], [0], [0], [1], [0, 0, 1, 1], [], []>} : vector<8x32xbf16>, vector<32x32xbf16>, vector<8x32xf32> -> vector<8x32xf32>
    %c0_25 = arith.constant 0 : index
    %c0_26 = arith.constant 0 : index
    %c0_27 = arith.constant 0 : index
    %25 = vector.load %arg7[%c0_25, %c0_26, %c0_27] : memref<1x1x32xf32, #tpu.memory_space<vmem>>, vector<1x1x32xf32>
    %26 = vector.shape_cast %25 : vector<1x1x32xf32> to vector<1x32xf32>
    %27 = vector.broadcast %26 : vector<1x32xf32> to vector<8x32xf32>
    %28 = arith.addf %24, %27 : vector<8x32xf32>
    %cst_28 = arith.constant 0.353553385 : f32
    %29 = vector.broadcast %cst_28 : f32 to vector<8x32xf32>
    %30 = arith.mulf %28, %29 : vector<8x32xf32>
    %31 = arith.truncf %30 : vector<8x32xf32> to vector<8x32xbf16>
    %32 = vector.extract_strided_slice %31 {offsets = [0, 0], sizes = [8, 8], strides = [1, 1]} : vector<8x32xbf16> to vector<8x8xbf16>
    %33 = vector.extract_strided_slice %18 {offsets = [0, 0], sizes = [8, 8], strides = [1, 1]} : vector<8x32xbf16> to vector<8x8xbf16>
    %34 = vector.extract_strided_slice %19 {offsets = [0, 0], sizes = [8, 8], strides = [1, 1]} : vector<8x32xbf16> to vector<8x8xbf16>
    %cst_29 = arith.constant dense<0.000000e+00> : vector<8x8xf32>
    %35 = tpu.matmul %32, %33, %cst_29 {dimension_numbers = #tpu.dot_dimension_numbers<[1], [1], [0], [0], [0, 0, 1, 0], [], []>} : vector<8x8xbf16>, vector<8x8xbf16>, vector<8x8xf32> -> vector<8x8xf32>
    %cst_30 = arith.constant dense<0xFF800000> : vector<8xf32>
    %36 = vector.multi_reduction <maximumf>, %35, %cst_30 [1] : vector<8x8xf32> to vector<8xf32>
    %37 = vector.shape_cast %36 : vector<8xf32> to vector<8x1xf32>
    %38 = vector.broadcast %37 : vector<8x1xf32> to vector<8x8xf32>
    %39 = arith.subf %35, %38 : vector<8x8xf32>
    %40 = math.exp %39 : vector<8x8xf32>
    %cst_31 = arith.constant dense<0.000000e+00> : vector<8xf32>
    %41 = vector.multi_reduction <add>, %40, %cst_31 [1] : vector<8x8xf32> to vector<8xf32>
    %42 = vector.shape_cast %41 : vector<8xf32> to vector<8x1xf32>
    %43 = tpu.reciprocal %42 {approx = true} : vector<8x1xf32> -> vector<8x1xf32>
    %44 = vector.broadcast %43 : vector<8x1xf32> to vector<8x8xf32>
    %45 = arith.mulf %40, %44 : vector<8x8xf32>
    %c0_32 = arith.constant 0 : index
    %c0_33 = arith.constant 0 : index
    %c0_34 = arith.constant 0 : index
    %c0_35 = arith.constant 0 : index
    %46 = vector.load %arg15[%c0_32, %c0_33, %c0_34, %c0_35] : memref<1x4x8x8xf32, #tpu.memory_space<vmem>>, vector<1x1x8x8xf32>
    %47 = vector.shape_cast %46 : vector<1x1x8x8xf32> to vector<8x8xf32>
    %48 = vector.shape_cast %45 : vector<8x8xf32> to vector<1x1x8x8xf32>
    tpu.vector_store %arg15[%c0_32, %c0_33, %c0_34, %c0_35], %48 {strides = array<i32>} : memref<1x4x8x8xf32, #tpu.memory_space<vmem>>, vector<1x1x8x8xf32>,
    %49 = arith.truncf %45 : vector<8x8xf32> to vector<8x8xbf16>
    %cst_36 = arith.constant dense<0.000000e+00> : vector<8x8xf32>
    %50 = tpu.matmul %49, %34, %cst_36 {dimension_numbers = #tpu.dot_dimension_numbers<[1], [0], [0], [1], [0, 0, 1, 1], [], []>} : vector<8x8xbf16>, vector<8x8xbf16>, vector<8x8xf32> -> vector<8x8xf32>
    %51 = vector.extract_strided_slice %31 {offsets = [0, 8], sizes = [8, 8], strides = [1, 1]} : vector<8x32xbf16> to vector<8x8xbf16>
    %52 = vector.extract_strided_slice %18 {offsets = [0, 8], sizes = [8, 8], strides = [1, 1]} : vector<8x32xbf16> to vector<8x8xbf16>
    %53 = vector.extract_strided_slice %19 {offsets = [0, 8], sizes = [8, 8], strides = [1, 1]} : vector<8x32xbf16> to vector<8x8xbf16>
    %cst_37 = arith.constant dense<0.000000e+00> : vector<8x8xf32>
    %54 = tpu.matmul %51, %52, %cst_37 {dimension_numbers = #tpu.dot_dimension_numbers<[1], [1], [0], [0], [0, 0, 1, 0], [], []>} : vector<8x8xbf16>, vector<8x8xbf16>, vector<8x8xf32> -> vector<8x8xf32>
    %cst_38 = arith.constant dense<0xFF800000> : vector<8xf32>
    %55 = vector.multi_reduction <maximumf>, %54, %cst_38 [1] : vector<8x8xf32> to vector<8xf32>
    %56 = vector.shape_cast %55 : vector<8xf32> to vector<8x1xf32>
    %57 = vector.broadcast %56 : vector<8x1xf32> to vector<8x8xf32>
    %58 = arith.subf %54, %57 : vector<8x8xf32>
    %59 = math.exp %58 : vector<8x8xf32>
    %cst_39 = arith.constant dense<0.000000e+00> : vector<8xf32>
    %60 = vector.multi_reduction <add>, %59, %cst_39 [1] : vector<8x8xf32> to vector<8xf32>
    %61 = vector.shape_cast %60 : vector<8xf32> to vector<8x1xf32>
    %62 = tpu.reciprocal %61 {approx = true} : vector<8x1xf32> -> vector<8x1xf32>
    %63 = vector.broadcast %62 : vector<8x1xf32> to vector<8x8xf32>
    %64 = arith.mulf %59, %63 : vector<8x8xf32>
    %c0_40 = arith.constant 0 : index
    %c1 = arith.constant 1 : index
    %c0_41 = arith.constant 0 : index
    %c0_42 = arith.constant 0 : index
    %65 = vector.load %arg15[%c0_40, %c1, %c0_41, %c0_42] : memref<1x4x8x8xf32, #tpu.memory_space<vmem>>, vector<1x1x8x8xf32>
    %66 = vector.shape_cast %65 : vector<1x1x8x8xf32> to vector<8x8xf32>
    %67 = vector.shape_cast %64 : vector<8x8xf32> to vector<1x1x8x8xf32>
    tpu.vector_store %arg15[%c0_40, %c1, %c0_41, %c0_42], %67 {strides = array<i32>} : memref<1x4x8x8xf32, #tpu.memory_space<vmem>>, vector<1x1x8x8xf32>,
    %68 = arith.truncf %64 : vector<8x8xf32> to vector<8x8xbf16>
    %cst_43 = arith.constant dense<0.000000e+00> : vector<8x8xf32>
    %69 = tpu.matmul %68, %53, %cst_43 {dimension_numbers = #tpu.dot_dimension_numbers<[1], [0], [0], [1], [0, 0, 1, 1], [], []>} : vector<8x8xbf16>, vector<8x8xbf16>, vector<8x8xf32> -> vector<8x8xf32>
    %70 = vector.extract_strided_slice %31 {offsets = [0, 16], sizes = [8, 8], strides = [1, 1]} : vector<8x32xbf16> to vector<8x8xbf16>
    %71 = vector.extract_strided_slice %18 {offsets = [0, 16], sizes = [8, 8], strides = [1, 1]} : vector<8x32xbf16> to vector<8x8xbf16>
    %72 = vector.extract_strided_slice %19 {offsets = [0, 16], sizes = [8, 8], strides = [1, 1]} : vector<8x32xbf16> to vector<8x8xbf16>
    %cst_44 = arith.constant dense<0.000000e+00> : vector<8x8xf32>
    %73 = tpu.matmul %70, %71, %cst_44 {dimension_numbers = #tpu.dot_dimension_numbers<[1], [1], [0], [0], [0, 0, 1, 0], [], []>} : vector<8x8xbf16>, vector<8x8xbf16>, vector<8x8xf32> -> vector<8x8xf32>
    %cst_45 = arith.constant dense<0xFF800000> : vector<8xf32>
    %74 = vector.multi_reduction <maximumf>, %73, %cst_45 [1] : vector<8x8xf32> to vector<8xf32>
    %75 = vector.shape_cast %74 : vector<8xf32> to vector<8x1xf32>
    %76 = vector.broadcast %75 : vector<8x1xf32> to vector<8x8xf32>
    %77 = arith.subf %73, %76 : vector<8x8xf32>
    %78 = math.exp %77 : vector<8x8xf32>
    %cst_46 = arith.constant dense<0.000000e+00> : vector<8xf32>
    %79 = vector.multi_reduction <add>, %78, %cst_46 [1] : vector<8x8xf32> to vector<8xf32>
    %80 = vector.shape_cast %79 : vector<8xf32> to vector<8x1xf32>
    %81 = tpu.reciprocal %80 {approx = true} : vector<8x1xf32> -> vector<8x1xf32>
    %82 = vector.broadcast %81 : vector<8x1xf32> to vector<8x8xf32>
    %83 = arith.mulf %78, %82 : vector<8x8xf32>
    %c0_47 = arith.constant 0 : index
    %c2 = arith.constant 2 : index
    %c0_48 = arith.constant 0 : index
    %c0_49 = arith.constant 0 : index
    %84 = vector.load %arg15[%c0_47, %c2, %c0_48, %c0_49] : memref<1x4x8x8xf32, #tpu.memory_space<vmem>>, vector<1x1x8x8xf32>
    %85 = vector.shape_cast %84 : vector<1x1x8x8xf32> to vector<8x8xf32>
    %86 = vector.shape_cast %83 : vector<8x8xf32> to vector<1x1x8x8xf32>
    tpu.vector_store %arg15[%c0_47, %c2, %c0_48, %c0_49], %86 {strides = array<i32>} : memref<1x4x8x8xf32, #tpu.memory_space<vmem>>, vector<1x1x8x8xf32>,
    %87 = arith.truncf %83 : vector<8x8xf32> to vector<8x8xbf16>
    %cst_50 = arith.constant dense<0.000000e+00> : vector<8x8xf32>
    %88 = tpu.matmul %87, %72, %cst_50 {dimension_numbers = #tpu.dot_dimension_numbers<[1], [0], [0], [1], [0, 0, 1, 1], [], []>} : vector<8x8xbf16>, vector<8x8xbf16>, vector<8x8xf32> -> vector<8x8xf32>
    %89 = vector.extract_strided_slice %31 {offsets = [0, 24], sizes = [8, 8], strides = [1, 1]} : vector<8x32xbf16> to vector<8x8xbf16>
    %90 = vector.extract_strided_slice %18 {offsets = [0, 24], sizes = [8, 8], strides = [1, 1]} : vector<8x32xbf16> to vector<8x8xbf16>
    %91 = vector.extract_strided_slice %19 {offsets = [0, 24], sizes = [8, 8], strides = [1, 1]} : vector<8x32xbf16> to vector<8x8xbf16>
    %cst_51 = arith.constant dense<0.000000e+00> : vector<8x8xf32>
    %92 = tpu.matmul %89, %90, %cst_51 {dimension_numbers = #tpu.dot_dimension_numbers<[1], [1], [0], [0], [0, 0, 1, 0], [], []>} : vector<8x8xbf16>, vector<8x8xbf16>, vector<8x8xf32> -> vector<8x8xf32>
    %cst_52 = arith.constant dense<0xFF800000> : vector<8xf32>
    %93 = vector.multi_reduction <maximumf>, %92, %cst_52 [1] : vector<8x8xf32> to vector<8xf32>
    %94 = vector.shape_cast %93 : vector<8xf32> to vector<8x1xf32>
    %95 = vector.broadcast %94 : vector<8x1xf32> to vector<8x8xf32>
    %96 = arith.subf %92, %95 : vector<8x8xf32>
    %97 = math.exp %96 : vector<8x8xf32>
    %cst_53 = arith.constant dense<0.000000e+00> : vector<8xf32>
    %98 = vector.multi_reduction <add>, %97, %cst_53 [1] : vector<8x8xf32> to vector<8xf32>
    %99 = vector.shape_cast %98 : vector<8xf32> to vector<8x1xf32>
    %100 = tpu.reciprocal %99 {approx = true} : vector<8x1xf32> -> vector<8x1xf32>
    %101 = vector.broadcast %100 : vector<8x1xf32> to vector<8x8xf32>
    %102 = arith.mulf %97, %101 : vector<8x8xf32>
    %c0_54 = arith.constant 0 : index
    %c3 = arith.constant 3 : index
    %c0_55 = arith.constant 0 : index
    %c0_56 = arith.constant 0 : index
    %103 = vector.load %arg15[%c0_54, %c3, %c0_55, %c0_56] : memref<1x4x8x8xf32, #tpu.memory_space<vmem>>, vector<1x1x8x8xf32>
    %104 = vector.shape_cast %103 : vector<1x1x8x8xf32> to vector<8x8xf32>
    %105 = vector.shape_cast %102 : vector<8x8xf32> to vector<1x1x8x8xf32>
    tpu.vector_store %arg15[%c0_54, %c3, %c0_55, %c0_56], %105 {strides = array<i32>} : memref<1x4x8x8xf32, #tpu.memory_space<vmem>>, vector<1x1x8x8xf32>,
    %106 = arith.truncf %102 : vector<8x8xf32> to vector<8x8xbf16>
    %cst_57 = arith.constant dense<0.000000e+00> : vector<8x8xf32>
    %107 = tpu.matmul %106, %91, %cst_57 {dimension_numbers = #tpu.dot_dimension_numbers<[1], [0], [0], [1], [0, 0, 1, 1], [], []>} : vector<8x8xbf16>, vector<8x8xbf16>, vector<8x8xf32> -> vector<8x8xf32>
    %108 = tpu.concatenate %50, %69, %88, %107 in 1 : vector<8x8xf32>, vector<8x8xf32>, vector<8x8xf32>, vector<8x8xf32> -> vector<8x32xf32>
    %109 = arith.truncf %108 : vector<8x32xf32> to vector<8x32xbf16>
    %c0_58 = arith.constant 0 : index
    %c0_59 = arith.constant 0 : index
    %c0_60 = arith.constant 0 : index
    %110 = vector.load %arg12[%c0_58, %c0_59, %c0_60] : memref<1x32x32xbf16, #tpu.memory_space<vmem>>, vector<1x32x32xbf16>
    %111 = vector.shape_cast %110 : vector<1x32x32xbf16> to vector<32x32xbf16>
    %cst_61 = arith.constant dense<0.000000e+00> : vector<8x32xf32>
    %112 = tpu.matmul %109, %111, %cst_61 {dimension_numbers = #tpu.dot_dimension_numbers<[1], [0], [0], [1], [0, 0, 1, 1], [], []>} : vector<8x32xbf16>, vector<32x32xbf16>, vector<8x32xf32> -> vector<8x32xf32>
    %c0_i32 = arith.constant 0 : i32
    %113 = arith.cmpi eq, %arg2, %c0_i32 : i32
    %114 = arith.extui %113 : i1 to i32
    %c0_i32_62 = arith.constant 0 : i32
    %115 = arith.cmpi ne, %114, %c0_i32_62 : i32
    scf.if %115 {
      %cst_69 = arith.constant 0.000000e+00 : f32
      %122 = vector.broadcast %cst_69 : f32 to vector<8x32xf32>
      %c0_70 = arith.constant 0 : index
      %c0_71 = arith.constant 0 : index
      %123 = vector.load %arg16[%c0_70, %c0_71] : memref<8x32xf32, #tpu.memory_space<vmem>>, vector<8x32xf32>
      tpu.vector_store %arg16[%c0_70, %c0_71], %122 {strides = array<i32>} : memref<8x32xf32, #tpu.memory_space<vmem>>, vector<8x32xf32>,
    } else {
    }
    %c0_63 = arith.constant 0 : index
    %c0_64 = arith.constant 0 : index
    %116 = vector.load %arg16[%c0_63, %c0_64] : memref<8x32xf32, #tpu.memory_space<vmem>>, vector<8x32xf32>
    %117 = arith.addf %116, %112 : vector<8x32xf32>
    %c0_65 = arith.constant 0 : index
    %c0_66 = arith.constant 0 : index
    %118 = vector.load %arg16[%c0_65, %c0_66] : memref<8x32xf32, #tpu.memory_space<vmem>>, vector<8x32xf32>
    tpu.vector_store %arg16[%c0_65, %c0_66], %117 {strides = array<i32>} : memref<8x32xf32, #tpu.memory_space<vmem>>, vector<8x32xf32>,
    %c0_i32_67 = arith.constant 0 : i32
    %119 = arith.cmpi eq, %arg2, %c0_i32_67 : i32
    %120 = arith.extui %119 : i1 to i32
    %c0_i32_68 = arith.constant 0 : i32
    %121 = arith.cmpi ne, %120, %c0_i32_68 : i32
    scf.if %121 {
      %c0_69 = arith.constant 0 : index
      %c0_70 = arith.constant 0 : index
      %122 = vector.load %arg16[%c0_69, %c0_70] : memref<8x32xf32, #tpu.memory_space<vmem>>, vector<8x32xf32>
      %c0_71 = arith.constant 0 : index
      %c0_72 = arith.constant 0 : index
      %123 = vector.load %arg13[%c0_71, %c0_72] : memref<1x32xf32, #tpu.memory_space<vmem>>, vector<1x32xf32>
      %124 = vector.broadcast %123 : vector<1x32xf32> to vector<8x32xf32>
      %125 = arith.addf %122, %124 : vector<8x32xf32>
      %c0_73 = arith.constant 0 : index
      %c0_74 = arith.constant 0 : index
      %c0_75 = arith.constant 0 : index
      %126 = vector.load %arg14[%c0_73, %c0_74, %c0_75] : memref<1x8x32xf32, #tpu.memory_space<vmem>>, vector<1x8x32xf32>
      %127 = vector.shape_cast %126 : vector<1x8x32xf32> to vector<8x32xf32>
      %128 = vector.shape_cast %125 : vector<8x32xf32> to vector<1x8x32xf32>
      tpu.vector_store %arg14[%c0_73, %c0_74, %c0_75], %128 {strides = array<i32>} : memref<1x8x32xf32, #tpu.memory_space<vmem>>, vector<1x8x32xf32>,
    } else {
    }
    return
  }
  func.func @transform_0(%arg0: i32, %arg1: i32, %arg2: i32) -> (i32, i32, i32) {
    %c0_i32 = arith.constant 0 : i32
    %c0_i32_0 = arith.constant 0 : i32
    return %arg0, %arg1, %c0_i32 : i32, i32, i32
  }
  func.func @transform_1(%arg0: i32, %arg1: i32, %arg2: i32) -> (i32, i32, i32) {
    %c0_i32 = arith.constant 0 : i32
    %c0_i32_0 = arith.constant 0 : i32
    %c0_i32_1 = arith.constant 0 : i32
    return %arg0, %c0_i32, %c0_i32_0 : i32, i32, i32
  }
  func.func @transform_2(%arg0: i32, %arg1: i32, %arg2: i32) -> (i32, i32, i32) {
    %c0_i32 = arith.constant 0 : i32
    %c0_i32_0 = arith.constant 0 : i32
    %c0_i32_1 = arith.constant 0 : i32
    return %arg0, %c0_i32, %c0_i32_0 : i32, i32, i32
  }
  func.func @transform_3(%arg0: i32, %arg1: i32, %arg2: i32) -> (i32, i32, i32) {
    %c0_i32 = arith.constant 0 : i32
    %c0_i32_0 = arith.constant 0 : i32
    %c0_i32_1 = arith.constant 0 : i32
    return %arg2, %c0_i32, %c0_i32_0 : i32, i32, i32
  }
  func.func @transform_4(%arg0: i32, %arg1: i32, %arg2: i32) -> (i32, i32, i32) {
    %c0_i32 = arith.constant 0 : i32
    %c0_i32_0 = arith.constant 0 : i32
    %c0_i32_1 = arith.constant 0 : i32
    return %arg2, %c0_i32, %c0_i32_0 : i32, i32, i32
  }
  func.func @transform_5(%arg0: i32, %arg1: i32, %arg2: i32) -> (i32, i32, i32) {
    %c0_i32 = arith.constant 0 : i32
    %c0_i32_0 = arith.constant 0 : i32
    %c0_i32_1 = arith.constant 0 : i32
    return %arg2, %c0_i32, %c0_i32_0 : i32, i32, i32
  }
  func.func @transform_6(%arg0: i32, %arg1: i32, %arg2: i32) -> (i32, i32, i32) {
    %c0_i32 = arith.constant 0 : i32
    %c0_i32_0 = arith.constant 0 : i32
    %c0_i32_1 = arith.constant 0 : i32
    return %arg2, %c0_i32, %c0_i32_0 : i32, i32, i32
  }
  func.func @transform_7(%arg0: i32, %arg1: i32, %arg2: i32) -> (i32, i32, i32) {
    %c0_i32 = arith.constant 0 : i32
    %c0_i32_0 = arith.constant 0 : i32
    %c0_i32_1 = arith.constant 0 : i32
    return %arg2, %c0_i32, %c0_i32_0 : i32, i32, i32
  }
  func.func @transform_8(%arg0: i32, %arg1: i32, %arg2: i32) -> (i32, i32, i32) {
    %c0_i32 = arith.constant 0 : i32
    %c0_i32_0 = arith.constant 0 : i32
    %c0_i32_1 = arith.constant 0 : i32
    return %arg2, %c0_i32, %c0_i32_0 : i32, i32, i32
  }
  func.func @transform_9(%arg0: i32, %arg1: i32, %arg2: i32) -> (i32, i32, i32) {
    %c0_i32 = arith.constant 0 : i32
    %c0_i32_0 = arith.constant 0 : i32
    %c0_i32_1 = arith.constant 0 : i32
    return %arg2, %c0_i32, %c0_i32_0 : i32, i32, i32
  }
  func.func @transform_10(%arg0: i32, %arg1: i32, %arg2: i32) -> (i32, i32) {
    %c0_i32 = arith.constant 0 : i32
    %c0_i32_0 = arith.constant 0 : i32
    %c0_i32_1 = arith.constant 0 : i32
    return %c0_i32, %c0_i32_0 : i32, i32
  }
  func.func @transform_11(%arg0: i32, %arg1: i32, %arg2: i32) -> (i32, i32, i32) {
    %c0_i32 = arith.constant 0 : i32
    %c0_i32_0 = arith.constant 0 : i32
    return %arg0, %arg1, %c0_i32 : i32, i32, i32
  }
  func.func @transform_12(%arg0: i32, %arg1: i32, %arg2: i32) -> (i32, i32, i32, i32) {
    %c0_i32 = arith.constant 0 : i32
    %c0_i32_0 = arith.constant 0 : i32
    return %arg0, %arg2, %arg1, %c0_i32 : i32, i32, i32, i32
  }
}

</mosaic_0001>

<llo_original>
// kernel: tpu_custom_call.1
$region0: #{tpu_custom_call.1}
  #allocation0 [shape = 'u32[]', space=smem, size = 0x4, offset = 0x4, fixed_abs, tag = 'smem constant byte address 0x4 - core index']
  #allocation1 [shape = 'u32[72,128]{1,0:T(1,128)}', space=vmem, size = 0x9000, scoped, tag = 'internal scratch']
  #allocation2 [shape = 'f32[8,32]{1,0:T(8,128)}', space=vmem, size = 0x1000, scoped, tag = 'scratch operand']
  %s0 = inlined_call_operand.hbm [shape: bf16[2,8,32], index: 0, kind: input, shape index: {}]
  %s1 = inlined_call_operand.hbm [shape: bf16[2,8,32], index: 1, kind: input, shape index: {}]
  %s2 = inlined_call_operand.hbm [shape: bf16[2,8,32], index: 2, kind: input, shape index: {}]
  %s3 = inlined_call_operand.hbm [shape: bf16[1,32,32], index: 3, kind: input, shape index: {}]
  %s4 = inlined_call_operand.vmem [shape: f32[1,1,32], index: 4, kind: input, shape index: {}]
  %s5 = inlined_call_operand.hbm [shape: bf16[1,32,32], index: 5, kind: input, shape index: {}]
  %s6 = inlined_call_operand.vmem [shape: f32[1,1,32], index: 6, kind: input, shape index: {}]
  %s7 = inlined_call_operand.hbm [shape: bf16[1,32,32], index: 7, kind: input, shape index: {}]
  %s8 = inlined_call_operand.vmem [shape: f32[1,1,32], index: 8, kind: input, shape index: {}]
  %s9 = inlined_call_operand.hbm [shape: bf16[1,32,32], index: 9, kind: input, shape index: {}]
  %s10 = inlined_call_operand.vmem [shape: f32[1,32], index: 10, kind: input, shape index: {}]
  %s11 = inlined_call_operand.hbm [shape: f32[2,8,32], index: 11, kind: output, shape index: {0}]
  %s12 = inlined_call_operand.hbm [shape: f32[2,4,8,8], index: 12, kind: output, shape index: {1}]
  %13 = xla_tuple %s11, %s12
  %s14 = sld [smem:[#allocation0]]
  $region121: #{tpu_custom_call.1} parent=0
    _
  %s16 = ssub.s32 1, %s14
  %s17 = scalar_select 0, %s16, %s14
  $region1: #{tpu_custom_call.1} parent=0
    #allocation3 [shape = 'u8[4096]{0}', space=vmem, size = 0x1000, scoped, tag = 'input window, operand 0']
    #allocation4 [shape = 's32[2]{0}', space=sflag, size = 0x8, scoped, tag = 'scoped memory for tpu_custom_call.1']
    #allocation5 [shape = 's32[2]{0}', space=sflag, size = 0x8, scoped, tag = 'scoped memory for tpu_custom_call.1']
    #allocation6 [shape = 'u8[4096]{0}', space=vmem, size = 0x1000, scoped, tag = 'input window, operand 1']
    #allocation7 [shape = 's32[2]{0}', space=sflag, size = 0x8, scoped, tag = 'scoped memory for tpu_custom_call.1']
    #allocation8 [shape = 'u8[4096]{0}', space=vmem, size = 0x1000, scoped, tag = 'input window, operand 2']
    #allocation9 [shape = 'u8[8192]{0}', space=vmem, size = 0x2000, scoped, tag = 'input window, operand 3, single buffered']
    #allocation10 [shape = 's32[1]{0}', space=sflag, size = 0x4, scoped, tag = 'scoped memory for tpu_custom_call.1']
    #allocation11 [shape = 'u8[8192]{0}', space=vmem, size = 0x2000, scoped, tag = 'input window, operand 5, single buffered']
    #allocation12 [shape = 'u8[8192]{0}', space=vmem, size = 0x2000, scoped, tag = 'input window, operand 7, single buffered']
    #allocation13 [shape = 's32[1]{0}', space=sflag, size = 0x4, scoped, tag = 'scoped memory for tpu_custom_call.1']
    #allocation14 [shape = 'u8[8192]{0}', space=vmem, size = 0x2000, scoped, tag = 'input window, operand 9, single buffered']
    #allocation15 [shape = 'u8[8192]{0}', space=vmem, size = 0x2000, scoped, tag = 'output window, operand 0']
    #allocation16 [shape = 'u8[32768]{0}', space=vmem, size = 0x8000, scoped, tag = 'output window, operand 1']
    #allocation17 [shape = 's32[2]{0}', space=sflag, size = 0x8, scoped, tag = 'scoped memory for tpu_custom_call.1']
    %18 = vsyncpa [#allocation4], 0
    %s19 = scalar_lea.sflag [#allocation4], 1
    %20 = vsyncpa %s19, 0
    %21 = vsyncpa [#allocation7], 0
    %s22 = scalar_lea.sflag [#allocation7], 1
    %23 = vsyncpa %s22, 0
    %24 = vsyncpa [#allocation10], 0
    %25 = vsyncpa [#allocation13], 0
    %26 = vsyncpa [#allocation5], 0
    %s27 = scalar_lea.sflag [#allocation5], 1
    %28 = vsyncpa %s27, 0
    %29 = vsyncpa [#allocation17], 0
    %s30 = scalar_lea.sflag [#allocation17], 1
    %31 = vsyncpa %s30, 0
    loop: start=0, step=1, limit=4
    $region2: #{tpu_custom_call.1} parent=1 // loop_pre_header
      _
    $region3: #{tpu_custom_call.1} parent=1 // loop_header
      %s33 = sphi 0, %s37
      %p34 = scmp.ge.s32.totalorder %s33, 4
      %s40 = sphi 0, %s59
      %s41 = sphi 0, %s55
      %s42 = sphi 0, %s51
      %s43 = sphi 0, %s40
      %s44 = sphi 0, %s41
      %s45 = sphi 0, %s42
      %s46 = sphi 0, %s43
      %s47 = sphi 0, %s44
      %s48 = sphi 0, %s45
      %s64 = sphi 0, %s66
      %s67 = sphi 0, %s64
      %s68 = sphi 0, %s67
      %s84 = sphi 0, %s68
      %s90 = sphi 0, %s92
      %s93 = sphi 0, %s90
      %s94 = sphi 0, %s93
      %s110 = sphi 0, %s94
      %s116 = sphi 0, %s118
      %s119 = sphi 0, %s116
      %s120 = sphi 0, %s119
      %s136 = sphi 0, %s120
      %s142 = sphi 0, %s144
      %s145 = sphi 0, %s142
      %s146 = sphi 0, %s145
      %s162 = sphi 0, %s146
      %s168 = sphi 0, %s170
      %s171 = sphi 0, %s168
      %s172 = sphi 0, %s171
      %s188 = sphi 0, %s172
      %s194 = sphi 0, %s196
      %s197 = sphi 0, %s194
      %s198 = sphi 0, %s197
      %s214 = sphi 0, %s198
      %s220 = sphi 0, %s222
      %s223 = sphi 0, %s220
      %s224 = sphi 0, %s223
      %s240 = sphi 0, %s224
      %s246 = sphi 0, %s248
      %s249 = sphi 0, %s246
      %s250 = sphi 0, %s249
      %s266 = sphi 0, %s250
      %s272 = sphi 0, %s274
      %s275 = sphi 0, %s272
      %s276 = sphi 0, %s275
      %s292 = sphi 0, %s276
      %s298 = sphi 0, %s300
      %s301 = sphi 0, %s298
      %s302 = sphi 0, %s301
      %s318 = sphi 0, %s302
      %s322 = sphi 0, %s322
      %s324 = sphi 0, %s322
      %s325 = sphi 0, %s324
      %s339 = sphi 0, %s325
      %s347 = sphi 0, %s349
      %s350 = sphi 0, %s347
      %s351 = sphi 0, %s350
      %s367 = sphi 0, %s351
      %s377 = sphi 0, %s379
      %s380 = sphi 0, %s377
      %s381 = sphi 0, %s380
      %s397 = sphi 0, %s381
    $region4: #{tpu_custom_call.1} parent=1 // loop_header_branch
      %36 = sbr.rel (%p34) target = $region8
    $region5: #{tpu_custom_call.1} parent=1 // loop_body
      %s38 = ssub.s32 %s33, 1
      %s39 = ssub.s32 %s33, 2
      %s49 = sadd.s32 1, %s42
      %p50 = scmp.ge.s32.totalorder %s49, 1
      %s51 = scalar_select %p50, 0, %s49
      %s52 = sadd.s32 1, %s41
      %s53 = scalar_select %p50, %s52, %s41
      %p54 = scmp.ge.s32.totalorder %s53, 1
      %s55 = scalar_select %p54, 0, %s53
      %s56 = sadd.s32 1, %s40
      %s57 = scalar_select %p54, %s56, %s40
      %p58 = scmp.ge.s32.totalorder %s57, 2
      %s59 = scalar_select %p58, 0, %s57
      %s60 = ssub.s32 %s40, %s59
      %s61 = ssub.s32 %s41, %s55
      %s62 = sor.u32 %s60, %s61
      %p63 = scmp.eq.s32.totalorder %s62, 0
      %s65 = sadd.s32 %s64, 1
      %s66 = scalar_select %p63, %s64, %s65
      %p69 = pneg %p63
      %p70 = scmp.eq.s32.totalorder %s33, 1
      %p71 = por %p69, %p70
      %p72 = scmp.ne.s32.totalorder %s64, %s67
      %p73 = scmp.eq.s32.totalorder %s33, 0
      %p74 = por %p72, %p73
      %p75 = scmp.ne.s32.totalorder %s64, %s67
      %p76 = scmp.eq.s32.totalorder %s38, 1
      %p77 = por %p75, %p76
      %p78 = scmp.ne.s32.totalorder %s67, %s68
      %p79 = scmp.eq.s32.totalorder %s38, 0
      %p80 = por %p78, %p79
      %p81 = scmp.ne.s32.totalorder %s67, %s68
      %p82 = scmp.eq.s32.totalorder %s39, 1
      %p83 = por %p81, %p82
      %p85 = scmp.ne.s32.totalorder %s68, %s84
      %p86 = scmp.eq.s32.totalorder %s39, 0
      %p87 = por %p85, %p86
      %s88 = ssub.s32 %s40, %s59
      %p89 = scmp.eq.s32.totalorder %s88, 0
      %s91 = sadd.s32 %s90, 1
      %s92 = scalar_select %p89, %s90, %s91
      %p95 = pneg %p89
      %p96 = scmp.eq.s32.totalorder %s33, 1
      %p97 = por %p95, %p96
      %p98 = scmp.ne.s32.totalorder %s90, %s93
      %p99 = scmp.eq.s32.totalorder %s33, 0
      %p100 = por %p98, %p99
      %p101 = scmp.ne.s32.totalorder %s90, %s93
      %p102 = scmp.eq.s32.totalorder %s38, 1
      %p103 = por %p101, %p102
      %p104 = scmp.ne.s32.totalorder %s93, %s94
      %p105 = scmp.eq.s32.totalorder %s38, 0
      %p106 = por %p104, %p105
      %p107 = scmp.ne.s32.totalorder %s93, %s94
      %p108 = scmp.eq.s32.totalorder %s39, 1
      %p109 = por %p107, %p108
      %p111 = scmp.ne.s32.totalorder %s94, %s110
      %p112 = scmp.eq.s32.totalorder %s39, 0
      %p113 = por %p111, %p112
      %s114 = ssub.s32 %s40, %s59
      %p115 = scmp.eq.s32.totalorder %s114, 0
      %s117 = sadd.s32 %s116, 1
      %s118 = scalar_select %p115, %s116, %s117
      %p121 = pneg %p115
      %p122 = scmp.eq.s32.totalorder %s33, 1
      %p123 = por %p121, %p122
      %p124 = scmp.ne.s32.totalorder %s116, %s119
      %p125 = scmp.eq.s32.totalorder %s33, 0
      %p126 = por %p124, %p125
      %p127 = scmp.ne.s32.totalorder %s116, %s119
      %p128 = scmp.eq.s32.totalorder %s38, 1
      %p129 = por %p127, %p128
      %p130 = scmp.ne.s32.totalorder %s119, %s120
      %p131 = scmp.eq.s32.totalorder %s38, 0
      %p132 = por %p130, %p131
      %p133 = scmp.ne.s32.totalorder %s119, %s120
      %p134 = scmp.eq.s32.totalorder %s39, 1
      %p135 = por %p133, %p134
      %p137 = scmp.ne.s32.totalorder %s120, %s136
      %p138 = scmp.eq.s32.totalorder %s39, 0
      %p139 = por %p137, %p138
      %s140 = ssub.s32 %s42, %s51
      %p141 = scmp.eq.s32.totalorder %s140, 0
      %s143 = sadd.s32 %s142, 1
      %s144 = scalar_select %p141, %s142, %s143
      %p147 = pneg %p141
      %p148 = scmp.eq.s32.totalorder %s33, 1
      %p149 = por %p147, %p148
      %p150 = scmp.ne.s32.totalorder %s142, %s145
      %p151 = scmp.eq.s32.totalorder %s33, 0
      %p152 = por %p150, %p151
      %p153 = scmp.ne.s32.totalorder %s142, %s145
      %p154 = scmp.eq.s32.totalorder %s38, 1
      %p155 = por %p153, %p154
      %p156 = scmp.ne.s32.totalorder %s145, %s146
      %p157 = scmp.eq.s32.totalorder %s38, 0
      %p158 = por %p156, %p157
      %p159 = scmp.ne.s32.totalorder %s145, %s146
      %p160 = scmp.eq.s32.totalorder %s39, 1
      %p161 = por %p159, %p160
      %p163 = scmp.ne.s32.totalorder %s146, %s162
      %p164 = scmp.eq.s32.totalorder %s39, 0
      %p165 = por %p163, %p164
      %s166 = ssub.s32 %s42, %s51
      %p167 = scmp.eq.s32.totalorder %s166, 0
      %s169 = sadd.s32 %s168, 1
      %s170 = scalar_select %p167, %s168, %s169
      %p173 = pneg %p167
      %p174 = scmp.eq.s32.totalorder %s33, 1
      %p175 = por %p173, %p174
      %p176 = scmp.ne.s32.totalorder %s168, %s171
      %p177 = scmp.eq.s32.totalorder %s33, 0
      %p178 = por %p176, %p177
      %p179 = scmp.ne.s32.totalorder %s168, %s171
      %p180 = scmp.eq.s32.totalorder %s38, 1
      %p181 = por %p179, %p180
      %p182 = scmp.ne.s32.totalorder %s171, %s172
      %p183 = scmp.eq.s32.totalorder %s38, 0
      %p184 = por %p182, %p183
      %p185 = scmp.ne.s32.totalorder %s171, %s172
      %p186 = scmp.eq.s32.totalorder %s39, 1
      %p187 = por %p185, %p186
      %p189 = scmp.ne.s32.totalorder %s172, %s188
      %p190 = scmp.eq.s32.totalorder %s39, 0
      %p191 = por %p189, %p190
      %s192 = ssub.s32 %s42, %s51
      %p193 = scmp.eq.s32.totalorder %s192, 0
      %s195 = sadd.s32 %s194, 1
      %s196 = scalar_select %p193, %s194, %s195
      %p199 = pneg %p193
      %p200 = scmp.eq.s32.totalorder %s33, 1
      %p201 = por %p199, %p200
      %p202 = scmp.ne.s32.totalorder %s194, %s197
      %p203 = scmp.eq.s32.totalorder %s33, 0
      %p204 = por %p202, %p203
      %p205 = scmp.ne.s32.totalorder %s194, %s197
      %p206 = scmp.eq.s32.totalorder %s38, 1
      %p207 = por %p205, %p206
      %p208 = scmp.ne.s32.totalorder %s197, %s198
      %p209 = scmp.eq.s32.totalorder %s38, 0
      %p210 = por %p208, %p209
      %p211 = scmp.ne.s32.totalorder %s197, %s198
      %p212 = scmp.eq.s32.totalorder %s39, 1
      %p213 = por %p211, %p212
      %p215 = scmp.ne.s32.totalorder %s198, %s214
      %p216 = scmp.eq.s32.totalorder %s39, 0
      %p217 = por %p215, %p216
      %s218 = ssub.s32 %s42, %s51
      %p219 = scmp.eq.s32.totalorder %s218, 0
      %s221 = sadd.s32 %s220, 1
      %s222 = scalar_select %p219, %s220, %s221
      %p225 = pneg %p219
      %p226 = scmp.eq.s32.totalorder %s33, 1
      %p227 = por %p225, %p226
      %p228 = scmp.ne.s32.totalorder %s220, %s223
      %p229 = scmp.eq.s32.totalorder %s33, 0
      %p230 = por %p228, %p229
      %p231 = scmp.ne.s32.totalorder %s220, %s223
      %p232 = scmp.eq.s32.totalorder %s38, 1
      %p233 = por %p231, %p232
      %p234 = scmp.ne.s32.totalorder %s223, %s224
      %p235 = scmp.eq.s32.totalorder %s38, 0
      %p236 = por %p234, %p235
      %p237 = scmp.ne.s32.totalorder %s223, %s224
      %p238 = scmp.eq.s32.totalorder %s39, 1
      %p239 = por %p237, %p238
      %p241 = scmp.ne.s32.totalorder %s224, %s240
      %p242 = scmp.eq.s32.totalorder %s39, 0
      %p243 = por %p241, %p242
      %s244 = ssub.s32 %s42, %s51
      %p245 = scmp.eq.s32.totalorder %s244, 0
      %s247 = sadd.s32 %s246, 1
      %s248 = scalar_select %p245, %s246, %s247
      %p251 = pneg %p245
      %p252 = scmp.eq.s32.totalorder %s33, 1
      %p253 = por %p251, %p252
      %p254 = scmp.ne.s32.totalorder %s246, %s249
      %p255 = scmp.eq.s32.totalorder %s33, 0
      %p256 = por %p254, %p255
      %p257 = scmp.ne.s32.totalorder %s246, %s249
      %p258 = scmp.eq.s32.totalorder %s38, 1
      %p259 = por %p257, %p258
      %p260 = scmp.ne.s32.totalorder %s249, %s250
      %p261 = scmp.eq.s32.totalorder %s38, 0
      %p262 = por %p260, %p261
      %p263 = scmp.ne.s32.totalorder %s249, %s250
      %p264 = scmp.eq.s32.totalorder %s39, 1
      %p265 = por %p263, %p264
      %p267 = scmp.ne.s32.totalorder %s250, %s266
      %p268 = scmp.eq.s32.totalorder %s39, 0
      %p269 = por %p267, %p268
      %s270 = ssub.s32 %s42, %s51
      %p271 = scmp.eq.s32.totalorder %s270, 0
      %s273 = sadd.s32 %s272, 1
      %s274 = scalar_select %p271, %s272, %s273
      %p277 = pneg %p271
      %p278 = scmp.eq.s32.totalorder %s33, 1
      %p279 = por %p277, %p278
      %p280 = scmp.ne.s32.totalorder %s272, %s275
      %p281 = scmp.eq.s32.totalorder %s33, 0
      %p282 = por %p280, %p281
      %p283 = scmp.ne.s32.totalorder %s272, %s275
      %p284 = scmp.eq.s32.totalorder %s38, 1
      %p285 = por %p283, %p284
      %p286 = scmp.ne.s32.totalorder %s275, %s276
      %p287 = scmp.eq.s32.totalorder %s38, 0
      %p288 = por %p286, %p287
      %p289 = scmp.ne.s32.totalorder %s275, %s276
      %p290 = scmp.eq.s32.totalorder %s39, 1
      %p291 = por %p289, %p290
      %p293 = scmp.ne.s32.totalorder %s276, %s292
      %p294 = scmp.eq.s32.totalorder %s39, 0
      %p295 = por %p293, %p294
      %s296 = ssub.s32 %s42, %s51
      %p297 = scmp.eq.s32.totalorder %s296, 0
      %s299 = sadd.s32 %s298, 1
      %s300 = scalar_select %p297, %s298, %s299
      %p303 = pneg %p297
      %p304 = scmp.eq.s32.totalorder %s33, 1
      %p305 = por %p303, %p304
      %p306 = scmp.ne.s32.totalorder %s298, %s301
      %p307 = scmp.eq.s32.totalorder %s33, 0
      %p308 = por %p306, %p307
      %p309 = scmp.ne.s32.totalorder %s298, %s301
      %p310 = scmp.eq.s32.totalorder %s38, 1
      %p311 = por %p309, %p310
      %p312 = scmp.ne.s32.totalorder %s301, %s302
      %p313 = scmp.eq.s32.totalorder %s38, 0
      %p314 = por %p312, %p313
      %p315 = scmp.ne.s32.totalorder %s301, %s302
      %p316 = scmp.eq.s32.totalorder %s39, 1
      %p317 = por %p315, %p316
      %p319 = scmp.ne.s32.totalorder %s302, %s318
      %p320 = scmp.eq.s32.totalorder %s39, 0
      %p321 = por %p319, %p320
      %s323 = sadd.s32 %s322, 1
      %p326 = scmp.eq.s32.totalorder %s33, 1
      %p327 = scmp.ne.s32.totalorder %s322, %s324
      %p328 = scmp.eq.s32.totalorder %s33, 0
      %p329 = por %p327, %p328
      %p330 = scmp.ne.s32.totalorder %s322, %s324
      %p331 = scmp.eq.s32.totalorder %s38, 1
      %p332 = por %p330, %p331
      %p333 = scmp.ne.s32.totalorder %s324, %s325
      %p334 = scmp.eq.s32.totalorder %s38, 0
      %p335 = por %p333, %p334
      %p336 = scmp.ne.s32.totalorder %s324, %s325
      %p337 = scmp.eq.s32.totalorder %s39, 1
      %p338 = por %p336, %p337
      %p340 = scmp.ne.s32.totalorder %s325, %s339
      %p341 = scmp.eq.s32.totalorder %s39, 0
      %p342 = por %p340, %p341
      %s343 = ssub.s32 %s40, %s59
      %s344 = ssub.s32 %s41, %s55
      %s345 = sor.u32 %s343, %s344
      %p346 = scmp.eq.s32.totalorder %s345, 0
      %s348 = sadd.s32 %s347, 1
      %s349 = scalar_select %p346, %s347, %s348
      %p352 = pneg %p346
      %p353 = scmp.eq.s32.totalorder %s33, 1
      %p354 = por %p352, %p353
      %p355 = scmp.ne.s32.totalorder %s347, %s350
      %p356 = scmp.eq.s32.totalorder %s33, 0
      %p357 = por %p355, %p356
      %p358 = scmp.ne.s32.totalorder %s347, %s350
      %p359 = scmp.eq.s32.totalorder %s38, 1
      %p360 = por %p358, %p359
      %p361 = scmp.ne.s32.totalorder %s350, %s351
      %p362 = scmp.eq.s32.totalorder %s38, 0
      %p363 = por %p361, %p362
      %p364 = scmp.ne.s32.totalorder %s350, %s351
      %p365 = scmp.eq.s32.totalorder %s39, 1
      %p366 = por %p364, %p365
      %p368 = scmp.ne.s32.totalorder %s351, %s367
      %p369 = scmp.eq.s32.totalorder %s39, 0
      %p370 = por %p368, %p369
      %s371 = ssub.s32 %s40, %s59
      %s372 = ssub.s32 %s42, %s51
      %s373 = sor.u32 %s371, %s372
      %s374 = ssub.s32 %s41, %s55
      %s375 = sor.u32 %s373, %s374
      %p376 = scmp.eq.s32.totalorder %s375, 0
      %s378 = sadd.s32 %s377, 1
      %s379 = scalar_select %p376, %s377, %s378
      %p382 = pneg %p376
      %p383 = scmp.eq.s32.totalorder %s33, 1
      %p384 = por %p382, %p383
      %p385 = scmp.ne.s32.totalorder %s377, %s380
      %p386 = scmp.eq.s32.totalorder %s33, 0
      %p387 = por %p385, %p386
      %p388 = scmp.ne.s32.totalorder %s377, %s380
      %p389 = scmp.eq.s32.totalorder %s38, 1
      %p390 = por %p388, %p389
      %p391 = scmp.ne.s32.totalorder %s380, %s381
      %p392 = scmp.eq.s32.totalorder %s38, 0
      %p393 = por %p391, %p392
      %p394 = scmp.ne.s32.totalorder %s380, %s381
      %p395 = scmp.eq.s32.totalorder %s39, 1
      %p396 = por %p394, %p395
      %p398 = scmp.ne.s32.totalorder %s381, %s397
      %p399 = scmp.eq.s32.totalorder %s39, 0
      %p400 = por %p398, %p399
      %p401 = scmp.le.s32.totalorder 1, %s33
      %p402 = scmp.lt.s32.totalorder %s33, 3
      %p403 = pnand %p401, %p402
      %p404 = pneg %p403
      // Predicated region
      $region9: #{tpu_custom_call.1} parent=5 // pred_check
        _
      $region10: #{tpu_custom_call.1} parent=5 // pred_check_branch
        %406 = sbr.rel (%p403) target = $region12
      $region11: #{tpu_custom_call.1} parent=5 // pred_region
        %s407 = ssub.s32 %s33, 1
        // Predicated region
        $region13: #{tpu_custom_call.1} parent=11 // pred_check
          %p408 = pneg %p158
        $region14: #{tpu_custom_call.1} parent=11 // pred_check_branch
          %410 = sbr.rel (%p408) target = $region16
        $region15: #{tpu_custom_call.1} parent=11 // pred_region
          %412 = vsyncadd [#allocation10], 0
          %s413 = smul.addr %s45, 4
          %s414 = smul.addr %s413, 4
          %s415 = scalar_lea.hbm %s3, %s414
          %s416 = sshll.u32 %s415, 4
          %s417 = int_to_ptr.hbm [resolvable:$true] %s416
          %s418 = sshll.u32 [#allocation9], 4
          %s419 = int_to_ptr.vmem [resolvable:$true] %s418
          %424 = dma.hbm_to_vmem [thread:$0]  %s417, 256, %s419, [#allocation10], 64, 64, 4
        $region16: #{tpu_custom_call.1} parent=11 // pred_fallthru
          _
        // Predicated region
        $region17: #{tpu_custom_call.1} parent=11 // pred_check
          %p425 = pneg %p184
        $region18: #{tpu_custom_call.1} parent=11 // pred_check_branch
          %427 = sbr.rel (%p425) target = $region20
        $region19: #{tpu_custom_call.1} parent=11 // pred_region
          %p428 = scmp.lt.s32.totalorder %s45, 0
          %s429 = scalar_select %p428, %s45, 0
          %s430 = scalar_lea.vmem %s4, %s429
        $region20: #{tpu_custom_call.1} parent=11 // pred_fallthru
          _
        // Predicated region
        $region21: #{tpu_custom_call.1} parent=11 // pred_check
          %p431 = pneg %p210
        $region22: #{tpu_custom_call.1} parent=11 // pred_check_branch
          %433 = sbr.rel (%p431) target = $region24
        $region23: #{tpu_custom_call.1} parent=11 // pred_region
          %435 = vsyncadd [#allocation10], 0
          %s436 = smul.addr %s45, 4
          %s437 = smul.addr %s436, 4
          %s438 = scalar_lea.hbm %s5, %s437
          %s439 = sshll.u32 %s438, 4
          %s440 = int_to_ptr.hbm [resolvable:$true] %s439
          %s441 = sshll.u32 [#allocation11], 4
          %s442 = int_to_ptr.vmem [resolvable:$true] %s441
          %447 = dma.hbm_to_vmem [thread:$0]  %s440, 256, %s442, [#allocation10], 64, 64, 4
        $region24: #{tpu_custom_call.1} parent=11 // pred_fallthru
          _
        // Predicated region
        $region25: #{tpu_custom_call.1} parent=11 // pred_check
          %p448 = pneg %p236
        $region26: #{tpu_custom_call.1} parent=11 // pred_check_branch
          %450 = sbr.rel (%p448) target = $region28
        $region27: #{tpu_custom_call.1} parent=11 // pred_region
          %p451 = scmp.lt.s32.totalorder %s45, 0
          %s452 = scalar_select %p451, %s45, 0
          %s453 = scalar_lea.vmem %s6, %s452
        $region28: #{tpu_custom_call.1} parent=11 // pred_fallthru
          _
        // Predicated region
        $region29: #{tpu_custom_call.1} parent=11 // pred_check
          %p454 = pneg %p262
        $region30: #{tpu_custom_call.1} parent=11 // pred_check_branch
          %456 = sbr.rel (%p454) target = $region32
        $region31: #{tpu_custom_call.1} parent=11 // pred_region
          %458 = vsyncadd [#allocation13], 0
          %s459 = smul.addr %s45, 4
          %s460 = smul.addr %s459, 4
          %s461 = scalar_lea.hbm %s7, %s460
          %s462 = sshll.u32 %s461, 4
          %s463 = int_to_ptr.hbm [resolvable:$true] %s462
          %s464 = sshll.u32 [#allocation12], 4
          %s465 = int_to_ptr.vmem [resolvable:$true] %s464
          %470 = dma.hbm_to_vmem [thread:$0]  %s463, 256, %s465, [#allocation13], 64, 64, 4
        $region32: #{tpu_custom_call.1} parent=11 // pred_fallthru
          _
        // Predicated region
        $region33: #{tpu_custom_call.1} parent=11 // pred_check
          %p471 = pneg %p288
        $region34: #{tpu_custom_call.1} parent=11 // pred_check_branch
          %473 = sbr.rel (%p471) target = $region36
        $region35: #{tpu_custom_call.1} parent=11 // pred_region
          %p474 = scmp.lt.s32.totalorder %s45, 0
          %s475 = scalar_select %p474, %s45, 0
          %s476 = scalar_lea.vmem %s8, %s475
        $region36: #{tpu_custom_call.1} parent=11 // pred_fallthru
          _
        // Predicated region
        $region37: #{tpu_custom_call.1} parent=11 // pred_check
          %p477 = pneg %p314
        $region38: #{tpu_custom_call.1} parent=11 // pred_check_branch
          %479 = sbr.rel (%p477) target = $region40
        $region39: #{tpu_custom_call.1} parent=11 // pred_region
          %481 = vsyncadd [#allocation13], 0
          %s482 = smul.addr %s45, 4
          %s483 = smul.addr %s482, 4
          %s484 = scalar_lea.hbm %s9, %s483
          %s485 = sshll.u32 %s484, 4
          %s486 = int_to_ptr.hbm [resolvable:$true] %s485
          %s487 = sshll.u32 [#allocation14], 4
          %s488 = int_to_ptr.vmem [resolvable:$true] %s487
          %493 = dma.hbm_to_vmem [thread:$0]  %s486, 256, %s488, [#allocation13], 64, 64, 4
        $region40: #{tpu_custom_call.1} parent=11 // pred_fallthru
          _
        // Predicated region
        $region41: #{tpu_custom_call.1} parent=11 // pred_check
          %p494 = pneg %p335
        $region42: #{tpu_custom_call.1} parent=11 // pred_check_branch
          %496 = sbr.rel (%p494) target = $region44
        $region43: #{tpu_custom_call.1} parent=11 // pred_region
          _
        $region44: #{tpu_custom_call.1} parent=11 // pred_fallthru
          _
      $region12: #{tpu_custom_call.1} parent=5 // pred_fallthru
        _
      %p497 = scmp.lt.s32.totalorder %s33, 2
      // Predicated region
      $region45: #{tpu_custom_call.1} parent=5 // pred_check
        %p498 = pneg %p497
      $region46: #{tpu_custom_call.1} parent=5 // pred_check_branch
        %500 = sbr.rel (%p498) target = $region48
      $region47: #{tpu_custom_call.1} parent=5 // pred_region
        // Predicated region
        $region49: #{tpu_custom_call.1} parent=47 // pred_check
          %p501 = pneg %p74
        $region50: #{tpu_custom_call.1} parent=47 // pred_check_branch
          %503 = sbr.rel (%p501) target = $region52
        $region51: #{tpu_custom_call.1} parent=47 // pred_region
          %s504 = sand.u32 %s64, 1
          %s505 = scalar_lea.sflag [#allocation4], %s504
          %s506 = sand.u32 %s64, 1
          %s507 = smul.addr %s506, 4
          %s508 = scalar_lea.vmem [#allocation3], %s507
          %510 = vsyncadd %s505, 0
          %s511 = sadd.s32 %s41, %s40
          %s512 = smul.addr %s511, 4
          %s513 = scalar_lea.hbm %s0, %s512
          %s515 = sshll.u32 %s513, 4
          %s516 = int_to_ptr.hbm [resolvable:$true] %s515
          %s517 = sshll.u32 %s508, 4
          %s518 = int_to_ptr.vmem [resolvable:$true] %s517
          %520 = dma.hbm_to_vmem [thread:$0]  %s516, 64, %s518, %s505
        $region52: #{tpu_custom_call.1} parent=47 // pred_fallthru
          _
        // Predicated region
        $region53: #{tpu_custom_call.1} parent=47 // pred_check
          %p521 = pneg %p100
        $region54: #{tpu_custom_call.1} parent=47 // pred_check_branch
          %523 = sbr.rel (%p521) target = $region56
        $region55: #{tpu_custom_call.1} parent=47 // pred_region
          %s524 = sand.u32 %s33, 1
          %s525 = scalar_lea.sflag [#allocation7], %s524
          %s526 = sand.u32 %s90, 1
          %s527 = smul.addr %s526, 4
          %s528 = scalar_lea.vmem [#allocation6], %s527
          %530 = vsyncadd %s525, 0
          %s531 = smul.addr %s40, 4
          %s532 = scalar_lea.hbm %s1, %s531
          %s534 = sshll.u32 %s532, 4
          %s535 = int_to_ptr.hbm [resolvable:$true] %s534
          %s536 = sshll.u32 %s528, 4
          %s537 = int_to_ptr.vmem [resolvable:$true] %s536
          %539 = dma.hbm_to_vmem [thread:$0]  %s535, 64, %s537, %s525
        $region56: #{tpu_custom_call.1} parent=47 // pred_fallthru
          _
        // Predicated region
        $region57: #{tpu_custom_call.1} parent=47 // pred_check
          %p540 = pneg %p126
        $region58: #{tpu_custom_call.1} parent=47 // pred_check_branch
          %542 = sbr.rel (%p540) target = $region60
        $region59: #{tpu_custom_call.1} parent=47 // pred_region
          %s543 = sand.u32 %s33, 1
          %s544 = scalar_lea.sflag [#allocation7], %s543
          %s545 = sand.u32 %s116, 1
          %s546 = smul.addr %s545, 4
          %s547 = scalar_lea.vmem [#allocation8], %s546
          %549 = vsyncadd %s544, 0
          %s550 = smul.addr %s40, 4
          %s551 = scalar_lea.hbm %s2, %s550
          %s553 = sshll.u32 %s551, 4
          %s554 = int_to_ptr.hbm [resolvable:$true] %s553
          %s555 = sshll.u32 %s547, 4
          %s556 = int_to_ptr.vmem [resolvable:$true] %s555
          %558 = dma.hbm_to_vmem [thread:$0]  %s554, 64, %s556, %s544
        $region60: #{tpu_custom_call.1} parent=47 // pred_fallthru
          _
      $region48: #{tpu_custom_call.1} parent=5 // pred_fallthru
        _
      %p559 = scmp.le.s32.totalorder 1, %s33
      %p560 = scmp.lt.s32.totalorder %s33, 3
      %p561 = pnand %p559, %p560
      %p562 = pneg %p561
      // Predicated region
      $region61: #{tpu_custom_call.1} parent=5 // pred_check
        _
      $region62: #{tpu_custom_call.1} parent=5 // pred_check_branch
        %564 = sbr.rel (%p561) target = $region64
      $region63: #{tpu_custom_call.1} parent=5 // pred_region
        %s565 = ssub.s32 %s33, 1
        %s566 = sand.u32 %s67, 1
        %s567 = scalar_lea.sflag [#allocation4], %s566
        %s568 = sand.u32 %s67, 1
        %s569 = smul.addr %s568, 4
        %s570 = scalar_lea.vmem [#allocation3], %s569
        // Predicated region
        $region65: #{tpu_custom_call.1} parent=63 // pred_check
          %p571 = pneg %p80
        $region66: #{tpu_custom_call.1} parent=63 // pred_check_branch
          %573 = sbr.rel (%p571) target = $region68
        $region67: #{tpu_custom_call.1} parent=63 // pred_region
          %575 = dma.done %s567, 64
        $region68: #{tpu_custom_call.1} parent=63 // pred_fallthru
          _
        %s576 = sand.u32 %s38, 1
        %s577 = scalar_lea.sflag [#allocation7], %s576
        %s578 = sand.u32 %s93, 1
        %s579 = smul.addr %s578, 4
        %s580 = scalar_lea.vmem [#allocation6], %s579
        // Predicated region
        $region69: #{tpu_custom_call.1} parent=63 // pred_check
          %p581 = pneg %p106
        $region70: #{tpu_custom_call.1} parent=63 // pred_check_branch
          %583 = sbr.rel (%p581) target = $region72
        $region71: #{tpu_custom_call.1} parent=63 // pred_region
          %585 = dma.done %s577, 64
        $region72: #{tpu_custom_call.1} parent=63 // pred_fallthru
          _
        %s586 = sand.u32 %s38, 1
        %s587 = scalar_lea.sflag [#allocation7], %s586
        %s588 = sand.u32 %s119, 1
        %s589 = smul.addr %s588, 4
        %s590 = scalar_lea.vmem [#allocation8], %s589
        // Predicated region
        $region73: #{tpu_custom_call.1} parent=63 // pred_check
          %p591 = pneg %p132
        $region74: #{tpu_custom_call.1} parent=63 // pred_check_branch
          %593 = sbr.rel (%p591) target = $region76
        $region75: #{tpu_custom_call.1} parent=63 // pred_region
          %595 = dma.done %s587, 64
        $region76: #{tpu_custom_call.1} parent=63 // pred_fallthru
          _
        // Predicated region
        $region77: #{tpu_custom_call.1} parent=63 // pred_check
          %p596 = pneg %p158
        $region78: #{tpu_custom_call.1} parent=63 // pred_check_branch
          %598 = sbr.rel (%p596) target = $region80
        $region79: #{tpu_custom_call.1} parent=63 // pred_region
          %600 = dma.done [#allocation10], 256
        $region80: #{tpu_custom_call.1} parent=63 // pred_fallthru
          _
        // Predicated region
        $region81: #{tpu_custom_call.1} parent=63 // pred_check
          %p601 = pneg %p210
        $region82: #{tpu_custom_call.1} parent=63 // pred_check_branch
          %603 = sbr.rel (%p601) target = $region84
        $region83: #{tpu_custom_call.1} parent=63 // pred_region
          %605 = dma.done [#allocation10], 256
        $region84: #{tpu_custom_call.1} parent=63 // pred_fallthru
          _
        // Predicated region
        $region85: #{tpu_custom_call.1} parent=63 // pred_check
          %p606 = pneg %p262
        $region86: #{tpu_custom_call.1} parent=63 // pred_check_branch
          %608 = sbr.rel (%p606) target = $region88
        $region87: #{tpu_custom_call.1} parent=63 // pred_region
          %610 = dma.done [#allocation13], 256
        $region88: #{tpu_custom_call.1} parent=63 // pred_fallthru
          _
        // Predicated region
        $region89: #{tpu_custom_call.1} parent=63 // pred_check
          %p611 = pneg %p314
        $region90: #{tpu_custom_call.1} parent=63 // pred_check_branch
          %613 = sbr.rel (%p611) target = $region92
        $region91: #{tpu_custom_call.1} parent=63 // pred_region
          %615 = dma.done [#allocation13], 256
        $region92: #{tpu_custom_call.1} parent=63 // pred_fallthru
          _
        %s616 = sand.u32 %s67, 1
        %s617 = scalar_lea.sflag [#allocation4], %s616
        %s618 = sand.u32 %s67, 1
        %s619 = smul.addr %s618, 4
        %s620 = scalar_lea.vmem [#allocation3], %s619
        %p621 = pneg %p80
        %p622 = pneg %p77
        %s623 = sand.u32 %s38, 1
        %s624 = scalar_lea.sflag [#allocation7], %s623
        %s625 = sand.u32 %s93, 1
        %s626 = smul.addr %s625, 4
        %s627 = scalar_lea.vmem [#allocation6], %s626
        %p628 = pneg %p106
        %p629 = pneg %p103
        %s630 = sand.u32 %s38, 1
        %s631 = scalar_lea.sflag [#allocation7], %s630
        %s632 = sand.u32 %s119, 1
        %s633 = smul.addr %s632, 4
        %s634 = scalar_lea.vmem [#allocation8], %s633
        %p635 = pneg %p132
        %p636 = pneg %p129
        %p637 = pneg %p158
        %p638 = pneg %p155
        %p639 = scmp.lt.s32.totalorder %s45, 0
        %s640 = scalar_select %p639, %s45, 0
        %s641 = scalar_lea.vmem %s4, %s640
        %p642 = pneg %p184
        %p643 = pneg %p181
        %p644 = pneg %p210
        %p645 = pneg %p207
        %p646 = scmp.lt.s32.totalorder %s45, 0
        %s647 = scalar_select %p646, %s45, 0
        %s648 = scalar_lea.vmem %s6, %s647
        %p649 = pneg %p236
        %p650 = pneg %p233
        %p651 = pneg %p262
        %p652 = pneg %p259
        %p653 = scmp.lt.s32.totalorder %s45, 0
        %s654 = scalar_select %p653, %s45, 0
        %s655 = scalar_lea.vmem %s8, %s654
        %p656 = pneg %p288
        %p657 = pneg %p285
        %p658 = pneg %p314
        %p659 = pneg %p311
        %p660 = pneg %p335
        %p661 = pneg %p332
        %p662 = pneg %p363
        %p663 = pneg %p360
        %s664 = sand.u32 %s350, 1
        %s665 = scalar_lea.sflag [#allocation5], %s664
        %s666 = sand.u32 %s350, 1
        %s667 = smul.addr %s666, 8
        %s668 = scalar_lea.vmem [#allocation15], %s667
        %p669 = pneg %p393
        %p670 = pneg %p390
        %s671 = sand.u32 %s380, 1
        %s672 = scalar_lea.sflag [#allocation17], %s671
        %s673 = sand.u32 %s380, 1
        %s674 = smul.addr %s673, 32
        %s675 = scalar_lea.vmem [#allocation16], %s674
        %p676 = scmp.lt.s32.totalorder %s45, 0
        %s677 = scalar_select %p676, %s45, 0
        %s678 = scalar_lea.vmem %s4, %s677
        %p679 = scmp.lt.s32.totalorder %s45, 0
        %s680 = scalar_select %p679, %s45, 0
        %s681 = scalar_lea.vmem %s6, %s680
        %p682 = scmp.lt.s32.totalorder %s45, 0
        %s683 = scalar_select %p682, %s45, 0
        %s684 = scalar_lea.vmem %s8, %s683
        %s685 = smul.u32 4, %s45
        %v687 = vld [vmem:[%s580] sm:$0xf]
        %v688 = vld [vmem:[%s590] sm:$0xf]
        %v689 = vld [vmem:[#allocation11] sm:$0xf]
        %v690 = vld [vmem:[#allocation11 + $0x4] sm:$0xf]
        %v691 = vld [vmem:[#allocation11 + $0x8] sm:$0xf]
        %v692 = vld [vmem:[#allocation11 + $0xc] sm:$0xf]
        %v693 = vld [vmem:[%s681] sm:$0x1]
        %v695 = vperm.slane %v693, 0
        %v701 = vunpack.c.l.b16 %v689
        %v702 = vunpack.c.l.b16 %v690
        %v703 = vunpack.c.l.b16 %v691
        %v704 = vunpack.c.l.b16 %v692
        %v705 = vpack.c.b16 %v702, %v701
        %v706 = vpack.c.b16 %v704, %v703
        %vm709 = vcmask 261120
        %v711 = vsel %vm709, %v687, 0
        %713 = vmatpush.bf16.msra.mxu0 0
        %714 = vmatpush.bf16.msra.mxu0 0
        %715 = vmatpush.bf16.msra.mxu0 0
        %716 = vmatpush.bf16.msra.mxu0 0
        %717 = vmatpush.bf16.msra.mxu0 0
        %718 = vmatpush.bf16.msra.mxu0 0
        %719 = vmatpush.bf16.msra.mxu0 %v706
        %720 = vmatpush.bf16.msra.mxu0 %v705
        %721 = vmatmul.bf16.gmra.mxu0 %v711
        %v722 = vpop.f32.mrf.mxu0
        %v723 = vadd.f32 %v695, %v722
        %v724 = vpop.f32.mrf.mxu0
        %725 = vdwg.mxu0
        %v726 = vld [vmem:[#allocation12] sm:$0xf]
        %v727 = vld [vmem:[#allocation12 + $0x4] sm:$0xf]
        %v728 = vld [vmem:[#allocation12 + $0x8] sm:$0xf]
        %v729 = vld [vmem:[#allocation12 + $0xc] sm:$0xf]
        %v730 = vld [vmem:[%s684] sm:$0x1]
        %v732 = vperm.slane %v730, 0
        %v738 = vunpack.c.l.b16 %v726
        %v739 = vunpack.c.l.b16 %v727
        %v740 = vunpack.c.l.b16 %v728
        %v741 = vunpack.c.l.b16 %v729
        %v742 = vpack.c.b16 %v739, %v738
        %v743 = vpack.c.b16 %v741, %v740
        %v747 = vsel %vm709, %v688, 0
        %749 = vmatpush.bf16.msra.mxu0 0
        %750 = vmatpush.bf16.msra.mxu0 0
        %751 = vmatpush.bf16.msra.mxu0 0
        %752 = vmatpush.bf16.msra.mxu0 0
        %753 = vmatpush.bf16.msra.mxu0 0
        %754 = vmatpush.bf16.msra.mxu0 0
        %755 = vmatpush.bf16.msra.mxu0 %v743
        %756 = vmatpush.bf16.msra.mxu0 %v742
        %757 = vmatmul.bf16.gmra.mxu0 %v747
        %v758 = vpop.f32.mrf.mxu0
        %v759 = vadd.f32 %v732, %v758
        %v760 = vpop.f32.mrf.mxu0
        %761 = vdwg.mxu0
        %v762 = vpack.c.bf16 %v723, %v723
        %v763 = vpack.c.bf16 %v759, %v759
        %v764 = vld [vmem:[%s570] sm:$0xf]
        %v765 = vld [vmem:[#allocation9] sm:$0xf]
        %v766 = vld [vmem:[#allocation9 + $0x4] sm:$0xf]
        %v767 = vld [vmem:[#allocation9 + $0x8] sm:$0xf]
        %v768 = vld [vmem:[#allocation9 + $0xc] sm:$0xf]
        %v769 = vld [vmem:[%s678] sm:$0x1]
        %v771 = vperm.slane %v769, 0
        %v777 = vunpack.c.l.b16 %v765
        %v778 = vunpack.c.l.b16 %v766
        %v779 = vunpack.c.l.b16 %v767
        %v780 = vunpack.c.l.b16 %v768
        %v781 = vpack.c.b16 %v778, %v777
        %v782 = vpack.c.b16 %v780, %v779
        %v786 = vsel %vm709, %v764, 0
        %788 = vmatpush.bf16.msra.mxu0 0
        %789 = vmatpush.bf16.msra.mxu0 0
        %790 = vmatpush.bf16.msra.mxu0 0
        %791 = vmatpush.bf16.msra.mxu0 0
        %792 = vmatpush.bf16.msra.mxu0 0
        %793 = vmatpush.bf16.msra.mxu0 0
        %794 = vmatpush.bf16.msra.mxu0 %v782
        %795 = vmatpush.bf16.msra.mxu0 %v781
        %796 = vmatmul.bf16.gmra.mxu0 %v786
        %v797 = vpop.f32.mrf.mxu0
        %v798 = vadd.f32 %v771, %v797
        %v799 = vpop.f32.mrf.mxu0
        %800 = vdwg.mxu0
        %v801 = vmul.f32 %v798, 0.35355338
        %v802 = vpack.c.bf16 %v801, %v801
        %vm803 = vcmask 64512
        %v805 = vsel %vm803, %v802, 0
        %v808 = vsel %vm803, %v762, 0
        %810 = vmatpush.bf16.xpose.msra.mxu0 0
        %811 = vmatpush.bf16.xpose.msra.mxu0 0
        %812 = vmatpush.bf16.xpose.msra.mxu0 0
        %813 = vmatpush.bf16.xpose.msra.mxu0 0
        %814 = vmatpush.bf16.xpose.msra.mxu0 0
        %815 = vmatpush.bf16.xpose.msra.mxu0 0
        %816 = vmatpush.bf16.xpose.msra.mxu0 0
        %817 = vmatpush.bf16.xpose.msra.mxu0 %v808
        %818 = vmatmul.bf16.gmra.mxu0 %v805
        %v819 = vpop.f32.mrf.mxu0
        %v820 = vadd.f32 0.0, %v819
        %v821 = vpop.f32.mrf.mxu0
        %822 = vdwg.mxu0
        %v823 = vsel %vm803, %v820, -inf
        %824 = vmax.xlane.f32.xlu0 %v823
        %v825 = vpop.xlane.xlu0 %824
        %v826 = vsub.f32 %v820, %v825
        %v827 = vmul.f32 %v826, 1.442695
        %v828 = vpow.pop %v827
        %v829 = vsel %vm803, %v828, 0.0
        %830 = vadd.xlane.f32.xlu0 %v829
        %v831 = vpop.xlane.xlu0 %830
        %v832 = vrcp.pop %v831
        %v833 = vmul.f32 %v828, %v832
        %834 = vst.msk [vmem:[%s675] sm:$0xff] %vm803, %v833
        %v835 = vpack.c.bf16 %v833, %v833
        %v837 = vsel %vm803, %v835, 0
        %vm839 = vcmask 1043456
        %v841 = vsel %vm839, %v763, 0
        %843 = vmatpush.bf16.msra.mxu0 0
        %844 = vmatpush.bf16.msra.mxu0 0
        %845 = vmatpush.bf16.msra.mxu0 0
        %846 = vmatpush.bf16.msra.mxu0 0
        %847 = vmatpush.bf16.msra.mxu0 0
        %848 = vmatpush.bf16.msra.mxu0 0
        %849 = vmatpush.bf16.msra.mxu0 0
        %850 = vmatpush.bf16.msra.mxu0 %v841
        %851 = vmatmul.bf16.gmra.mxu0 %v837
        %v852 = vpop.f32.mrf.mxu0
        %v853 = vadd.f32 0.0, %v852
        %v854 = vpop.f32.mrf.mxu0
        %855 = vdwg.mxu0
        %v857 = vunpack.c.l.b16 %v802
        %v858 = vpack.c.b16 %v857, %v857
        %859 = vrot.lane.b32.xlu0 %v858, 120
        %v860 = vpop.permute.xlu0 %859
        %v862 = vunpack.c.l.b16 %v762
        %v863 = vpack.c.b16 %v862, %v862
        %864 = vrot.lane.b32.xlu0 %v863, 120
        %v865 = vpop.permute.xlu0 %864
        %v867 = vsel %vm803, %v860, 0
        %v870 = vsel %vm803, %v865, 0
        %872 = vmatpush.bf16.xpose.msra.mxu0 0
        %873 = vmatpush.bf16.xpose.msra.mxu0 0
        %874 = vmatpush.bf16.xpose.msra.mxu0 0
        %875 = vmatpush.bf16.xpose.msra.mxu0 0
        %876 = vmatpush.bf16.xpose.msra.mxu0 0
        %877 = vmatpush.bf16.xpose.msra.mxu0 0
        %878 = vmatpush.bf16.xpose.msra.mxu0 0
        %879 = vmatpush.bf16.xpose.msra.mxu0 %v870
        %880 = vmatmul.bf16.gmra.mxu0 %v867
        %v881 = vpop.f32.mrf.mxu0
        %v882 = vadd.f32 0.0, %v881
        %v883 = vpop.f32.mrf.mxu0
        %884 = vdwg.mxu0
        %v885 = vsel %vm803, %v882, -inf
        %886 = vmax.xlane.f32.xlu0 %v885
        %v887 = vpop.xlane.xlu0 %886
        %v888 = vsub.f32 %v882, %v887
        %v889 = vmul.f32 %v888, 1.442695
        %v890 = vpow.pop %v889
        %v891 = vsel %vm803, %v890, 0.0
        %892 = vadd.xlane.f32.xlu0 %v891
        %v893 = vpop.xlane.xlu0 %892
        %v894 = vrcp.pop %v893
        %v895 = vmul.f32 %v890, %v894
        %s896 = scalar_lea.vmem %s675, 8 [#allocation16]
        %897 = vst.msk [vmem:[%s896] sm:$0xff] %vm803, %v895
        %v898 = vpack.c.bf16 %v895, %v895
        %v900 = vunpack.c.l.b16 %v763
        %v901 = vpack.c.b16 %v900, %v900
        %902 = vrot.lane.b32.xlu0 %v901, 120
        %v903 = vpop.permute.xlu0 %902
        %v905 = vsel %vm803, %v898, 0
        %v908 = vsel %vm839, %v903, 0
        %910 = vmatpush.bf16.msra.mxu0 0
        %911 = vmatpush.bf16.msra.mxu0 0
        %912 = vmatpush.bf16.msra.mxu0 0
        %913 = vmatpush.bf16.msra.mxu0 0
        %914 = vmatpush.bf16.msra.mxu0 0
        %915 = vmatpush.bf16.msra.mxu0 0
        %916 = vmatpush.bf16.msra.mxu0 0
        %917 = vmatpush.bf16.msra.mxu0 %v908
        %918 = vmatmul.bf16.gmra.mxu0 %v905
        %v919 = vpop.f32.mrf.mxu0
        %v920 = vadd.f32 0.0, %v919
        %v921 = vpop.f32.mrf.mxu0
        %922 = vdwg.mxu0
        %923 = vrot.lane.b32.xlu0 %v858, 112
        %v924 = vpop.permute.xlu0 %923
        %925 = vrot.lane.b32.xlu0 %v863, 112
        %v926 = vpop.permute.xlu0 %925
        %v928 = vsel %vm803, %v924, 0
        %v931 = vsel %vm803, %v926, 0
        %933 = vmatpush.bf16.xpose.msra.mxu0 0
        %934 = vmatpush.bf16.xpose.msra.mxu0 0
        %935 = vmatpush.bf16.xpose.msra.mxu0 0
        %936 = vmatpush.bf16.xpose.msra.mxu0 0
        %937 = vmatpush.bf16.xpose.msra.mxu0 0
        %938 = vmatpush.bf16.xpose.msra.mxu0 0
        %939 = vmatpush.bf16.xpose.msra.mxu0 0
        %940 = vmatpush.bf16.xpose.msra.mxu0 %v931
        %941 = vmatmul.bf16.gmra.mxu0 %v928
        %v942 = vpop.f32.mrf.mxu0
        %v943 = vadd.f32 0.0, %v942
        %v944 = vpop.f32.mrf.mxu0
        %945 = vdwg.mxu0
        %v946 = vsel %vm803, %v943, -inf
        %947 = vmax.xlane.f32.xlu0 %v946
        %v948 = vpop.xlane.xlu0 %947
        %v949 = vsub.f32 %v943, %v948
        %v950 = vmul.f32 %v949, 1.442695
        %v951 = vpow.pop %v950
        %v952 = vsel %vm803, %v951, 0.0
        %953 = vadd.xlane.f32.xlu0 %v952
        %v954 = vpop.xlane.xlu0 %953
        %v955 = vrcp.pop %v954
        %v956 = vmul.f32 %v951, %v955
        %s957 = scalar_lea.vmem %s675, 16 [#allocation16]
        %958 = vst.msk [vmem:[%s957] sm:$0xff] %vm803, %v956
        %v959 = vpack.c.bf16 %v956, %v956
        %960 = vrot.lane.b32.xlu0 %v901, 112
        %v961 = vpop.permute.xlu0 %960
        %v963 = vsel %vm803, %v959, 0
        %v966 = vsel %vm839, %v961, 0
        %968 = vmatpush.bf16.msra.mxu0 0
        %969 = vmatpush.bf16.msra.mxu0 0
        %970 = vmatpush.bf16.msra.mxu0 0
        %971 = vmatpush.bf16.msra.mxu0 0
        %972 = vmatpush.bf16.msra.mxu0 0
        %973 = vmatpush.bf16.msra.mxu0 0
        %974 = vmatpush.bf16.msra.mxu0 0
        %975 = vmatpush.bf16.msra.mxu0 %v966
        %976 = vmatmul.bf16.gmra.mxu0 %v963
        %v977 = vpop.f32.mrf.mxu0
        %v978 = vadd.f32 0.0, %v977
        %v979 = vpop.f32.mrf.mxu0
        %980 = vdwg.mxu0
        %981 = vrot.lane.b32.xlu0 %v858, 104
        %v982 = vpop.permute.xlu0 %981
        %983 = vrot.lane.b32.xlu0 %v863, 104
        %v984 = vpop.permute.xlu0 %983
        %v986 = vsel %vm803, %v982, 0
        %v989 = vsel %vm803, %v984, 0
        %991 = vmatpush.bf16.xpose.msra.mxu0 0
        %992 = vmatpush.bf16.xpose.msra.mxu0 0
        %993 = vmatpush.bf16.xpose.msra.mxu0 0
        %994 = vmatpush.bf16.xpose.msra.mxu0 0
        %995 = vmatpush.bf16.xpose.msra.mxu0 0
        %996 = vmatpush.bf16.xpose.msra.mxu0 0
        %997 = vmatpush.bf16.xpose.msra.mxu0 0
        %998 = vmatpush.bf16.xpose.msra.mxu0 %v989
        %999 = vmatmul.bf16.gmra.mxu0 %v986
        %v1000 = vpop.f32.mrf.mxu0
        %v1001 = vadd.f32 0.0, %v1000
        %v1002 = vpop.f32.mrf.mxu0
        %1003 = vdwg.mxu0
        %v1004 = vsel %vm803, %v1001, -inf
        %1005 = vmax.xlane.f32.xlu0 %v1004
        %v1006 = vpop.xlane.xlu0 %1005
        %v1007 = vsub.f32 %v1001, %v1006
        %v1008 = vmul.f32 %v1007, 1.442695
        %v1009 = vpow.pop %v1008
        %v1010 = vsel %vm803, %v1009, 0.0
        %1011 = vadd.xlane.f32.xlu0 %v1010
        %v1012 = vpop.xlane.xlu0 %1011
        %v1013 = vrcp.pop %v1012
        %v1014 = vmul.f32 %v1009, %v1013
        %s1015 = scalar_lea.vmem %s675, 24 [#allocation16]
        %1016 = vst.msk [vmem:[%s1015] sm:$0xff] %vm803, %v1014
        %v1017 = vpack.c.bf16 %v1014, %v1014
        %1018 = vrot.lane.b32.xlu0 %v901, 104
        %v1019 = vpop.permute.xlu0 %1018
        %v1021 = vsel %vm803, %v1017, 0
        %v1024 = vsel %vm839, %v1019, 0
        %1026 = vmatpush.bf16.msra.mxu0 0
        %1027 = vmatpush.bf16.msra.mxu0 0
        %1028 = vmatpush.bf16.msra.mxu0 0
        %1029 = vmatpush.bf16.msra.mxu0 0
        %1030 = vmatpush.bf16.msra.mxu0 0
        %1031 = vmatpush.bf16.msra.mxu0 0
        %1032 = vmatpush.bf16.msra.mxu0 0
        %1033 = vmatpush.bf16.msra.mxu0 %v1024
        %1034 = vmatmul.bf16.gmra.mxu0 %v1021
        %v1035 = vpop.f32.mrf.mxu0
        %v1036 = vadd.f32 0.0, %v1035
        %v1037 = vpop.f32.mrf.mxu0
        %1038 = vdwg.mxu0
        %1040 = vrot.lane.b32.xlu0 %v920, 8
        %v1041 = vpop.permute.xlu0 %1040
        %1044 = vrot.lane.b32.xlu0 %v978, 16
        %v1045 = vpop.permute.xlu0 %1044
        %1048 = vrot.lane.b32.xlu0 %v1036, 24
        %v1049 = vpop.permute.xlu0 %1048
        %v1051 = vsel %vm803, %v853, %v1041
        %vm1052 = vcmask 130048
        %v1053 = vsel %vm1052, %v1051, %v1045
        %vm1054 = vcmask 195584
        %v1055 = vsel %vm1054, %v1053, %v1049
        %v1056 = vpack.c.bf16 %v1055, %v1055
        %v1057 = vld [vmem:[#allocation14] sm:$0xf]
        %v1058 = vld [vmem:[#allocation14 + $0x4] sm:$0xf]
        %v1059 = vld [vmem:[#allocation14 + $0x8] sm:$0xf]
        %v1060 = vld [vmem:[#allocation14 + $0xc] sm:$0xf]
        %v1065 = vunpack.c.l.b16 %v1057
        %v1066 = vunpack.c.l.b16 %v1058
        %v1067 = vunpack.c.l.b16 %v1059
        %v1068 = vunpack.c.l.b16 %v1060
        %v1069 = vpack.c.b16 %v1066, %v1065
        %v1070 = vpack.c.b16 %v1068, %v1067
        %v1074 = vsel %vm709, %v1056, 0
        %1076 = vmatpush.bf16.msra.mxu0 0
        %1077 = vmatpush.bf16.msra.mxu0 0
        %1078 = vmatpush.bf16.msra.mxu0 0
        %1079 = vmatpush.bf16.msra.mxu0 0
        %1080 = vmatpush.bf16.msra.mxu0 0
        %1081 = vmatpush.bf16.msra.mxu0 0
        %1082 = vmatpush.bf16.msra.mxu0 %v1070
        %1083 = vmatpush.bf16.msra.mxu0 %v1069
        %1084 = vmatmul.bf16.gmra.mxu0 %v1074
        %v1085 = vpop.f32.mrf.mxu0
        %v1086 = vadd.f32 0.0, %v1085
        %v1087 = vpop.f32.mrf.mxu0
        %1088 = vdwg.mxu0
        %p1089 = scmp.eq.s32.totalorder %s45, 0
        // Predicated region
        $region93: #{tpu_custom_call.1} parent=63 // pred_check
          %p1090 = pneg %p1089
        $region94: #{tpu_custom_call.1} parent=63 // pred_check_branch
          %1092 = sbr.rel (%p1090) target = $region96
        $region95: #{tpu_custom_call.1} parent=63 // pred_region
          %1093 = vst.msk [vmem:[#allocation2] sm:$0xff] %vm709, 0.0
        $region96: #{tpu_custom_call.1} parent=63 // pred_fallthru
          _
        %v1094 = vld [vmem:[#allocation2] sm:$0xff]
        %v1095 = vadd.f32 %v1094, %v1086
        %1096 = vst.msk [vmem:[#allocation2] sm:$0xff] %vm709, %v1095
        // Predicated region
        $region97: #{tpu_custom_call.1} parent=63 // pred_check
          %p1097 = pneg %p1089
        $region98: #{tpu_custom_call.1} parent=63 // pred_check_branch
          %1099 = sbr.rel (%p1097) target = $region100
        $region99: #{tpu_custom_call.1} parent=63 // pred_region
          %v1100 = vld [vmem:[#allocation2] sm:$0xff]
          %v1101 = vld [vmem:[%s10] sm:$0x1]
          %v1103 = vperm.slane %v1101, 0
          %v1105 = vadd.f32 %v1100, %v1103
          %1106 = vst.msk [vmem:[%s668] sm:$0xff] %vm709, %v1105
        $region100: #{tpu_custom_call.1} parent=63 // pred_fallthru
          _
        %s1107 = sand.u32 %s350, 1
        %s1108 = scalar_lea.sflag [#allocation5], %s1107
        %s1109 = sand.u32 %s350, 1
        %s1110 = smul.addr %s1109, 8
        %s1111 = scalar_lea.vmem [#allocation15], %s1110
        %s1112 = sand.u32 %s380, 1
        %s1113 = scalar_lea.sflag [#allocation17], %s1112
        %s1114 = sand.u32 %s380, 1
        %s1115 = smul.addr %s1114, 32
        %s1116 = scalar_lea.vmem [#allocation16], %s1115
        // Predicated region
        $region101: #{tpu_custom_call.1} parent=63 // pred_check
          %p1117 = pneg %p360
        $region102: #{tpu_custom_call.1} parent=63 // pred_check_branch
          %1119 = sbr.rel (%p1117) target = $region104
        $region103: #{tpu_custom_call.1} parent=63 // pred_region
          %1121 = vsyncadd %s1108, 0
          %s1122 = sadd.s32 %s44, %s43
          %s1123 = smul.addr %s1122, 8
          %s1124 = scalar_lea.hbm %s11, %s1123
          %s1126 = sshll.u32 %s1111, 4
          %s1127 = int_to_ptr.vmem [resolvable:$true] %s1126
          %s1128 = sshll.u32 %s1124, 4
          %s1129 = int_to_ptr.hbm [resolvable:$true] %s1128
          %1131 = dma.vmem_to_hbm [thread:$0]  %s1127, 128, %s1129, %s1108
        $region104: #{tpu_custom_call.1} parent=63 // pred_fallthru
          _
        // Predicated region
        $region105: #{tpu_custom_call.1} parent=63 // pred_check
          %p1132 = pneg %p390
        $region106: #{tpu_custom_call.1} parent=63 // pred_check_branch
          %1134 = sbr.rel (%p1132) target = $region108
        $region107: #{tpu_custom_call.1} parent=63 // pred_region
          %s1135 = smul.u32 4, %s45
          %1137 = vsyncadd %s1113, 0
          %s1138 = sadd.s32 %s44, %s1135
          %s1139 = smul.addr %s43, 4
          %s1140 = sadd.s32 %s1138, %s1139
          %s1141 = smul.addr %s1140, 8
          %s1142 = scalar_lea.hbm %s12, %s1141
          %s1143 = sshll.u32 %s1116, 4
          %s1144 = int_to_ptr.vmem [resolvable:$true] %s1143
          %s1145 = sshll.u32 %s1142, 4
          %s1146 = int_to_ptr.hbm [resolvable:$true] %s1145
          %1151 = dma.vmem_to_hbm [thread:$0]  %s1144, 512, %s1146, %s1113, 128, 128, 8
        $region108: #{tpu_custom_call.1} parent=63 // pred_fallthru
          _
      $region64: #{tpu_custom_call.1} parent=5 // pred_fallthru
        _
      %p1152 = scmp.le.s32.totalorder 2, %s33
      // Predicated region
      $region109: #{tpu_custom_call.1} parent=5 // pred_check
        %p1153 = pneg %p1152
      $region110: #{tpu_custom_call.1} parent=5 // pred_check_branch
        %1155 = sbr.rel (%p1153) target = $region112
      $region111: #{tpu_custom_call.1} parent=5 // pred_region
        %s1156 = ssub.s32 %s33, 2
        // Predicated region
        $region113: #{tpu_custom_call.1} parent=111 // pred_check
          %p1157 = pneg %p366
        $region114: #{tpu_custom_call.1} parent=111 // pred_check_branch
          %1159 = sbr.rel (%p1157) target = $region116
        $region115: #{tpu_custom_call.1} parent=111 // pred_region
          %s1160 = sand.u32 %s351, 1
          %s1161 = scalar_lea.sflag [#allocation5], %s1160
          %s1162 = sand.u32 %s351, 1
          %s1163 = smul.addr %s1162, 8
          %s1164 = scalar_lea.vmem [#allocation15], %s1163
          %1166 = dma.done %s1161, 128
        $region116: #{tpu_custom_call.1} parent=111 // pred_fallthru
          _
        // Predicated region
        $region117: #{tpu_custom_call.1} parent=111 // pred_check
          %p1167 = pneg %p396
        $region118: #{tpu_custom_call.1} parent=111 // pred_check_branch
          %1169 = sbr.rel (%p1167) target = $region120
        $region119: #{tpu_custom_call.1} parent=111 // pred_region
          %s1170 = sand.u32 %s381, 1
          %s1171 = scalar_lea.sflag [#allocation17], %s1170
          %s1172 = sand.u32 %s381, 1
          %s1173 = smul.addr %s1172, 32
          %s1174 = scalar_lea.vmem [#allocation16], %s1173
          %1176 = dma.done %s1171, 512
        $region120: #{tpu_custom_call.1} parent=111 // pred_fallthru
          _
      $region112: #{tpu_custom_call.1} parent=5 // pred_fallthru
        _
    $region6: #{tpu_custom_call.1} parent=1 // loop_footer
      %s37 = sadd.s32 1, %s33
    $region7: #{tpu_custom_call.1} parent=1 // loop_footer_branch
      %32 = sbr.rel target = $region3
    $region8: #{tpu_custom_call.1} parent=1 // loop_exit
      _
    %1177 = vsyncpa [#allocation4], 1
    %s1178 = scalar_lea.sflag [#allocation4], 1
    %1179 = vsyncpa %s1178, 1
    %1180 = vsyncpa [#allocation7], 1
    %s1181 = scalar_lea.sflag [#allocation7], 1
    %1182 = vsyncpa %s1181, 1
    %1183 = vsyncpa [#allocation10], 1
    %1184 = vsyncpa [#allocation13], 1
    %1185 = vsyncpa [#allocation5], 1
    %s1186 = scalar_lea.sflag [#allocation5], 1
    %1187 = vsyncpa %s1186, 1
    %1188 = vsyncpa [#allocation17], 1
    %s1189 = scalar_lea.sflag [#allocation17], 1
    %1190 = vsyncpa %s1189, 1

</llo_original>
